<compile_context>
chip_gen: v7x
topology: tpu7x:2x2x1
jax: 0.10.0
libtpu: 0.0.40
codegen_flags: <defaults>
</compile_context>

<pallas_src>
import math

import jax
import jax.numpy as jnp
from jax import lax
from jax.experimental import pallas as pl
from jax.experimental.pallas import tpu as pltpu


_STATIC_UNROLL_MAX = 64          # D-chunks up to this size are statically unrolled
_W_TILE = 128                    # lane-dense W block; keeps the accumulator small
_NEG_HALF_LOG2E = -0.5 * math.log2(math.e)


def _round_up(n: int, m: int) -> int:
    return ((n + m - 1) // m) * m


def wavelet_kernel(x_ref, shifts_ref, weights_ref, w_inv2_ref, c2_ref, o_ref):
    # x_ref:       (bt, dt)  batch tile x D-chunk
    # shifts_ref:  (dt, wt)
    # weights_ref: (dt, wt)
    # w_inv2_ref:  (dt, wt)  weights * inv_scale^2
    # c2_ref:      (1,  wt)  -0.5 * log2(e) * inv_scale^2
    # o_ref:       (bt, wt)  resident f32 accumulator across the D grid axis
    d_step = pl.program_id(2)

    @pl.when(d_step == 0)
    def _init():
        o_ref[...] = jnp.zeros_like(o_ref)

    dt = x_ref.shape[1]
    c2 = c2_ref[...]             # (1, wt) — hoisted out of the loop
    acc = o_ref[...]             # (bt, wt)

    def contribution(x_col, sh_row, w_row, wi2_row):
        diff = x_col - sh_row                    # (bt, wt)
        d2 = diff * diff
        # (1 - t) * exp(-t/2) * w  ==  (w - w*inv2*d2) * exp2(c2*d2),  t = inv2*d2
        return (w_row - wi2_row * d2) * jnp.exp2(c2 * d2)

    if dt <= _STATIC_UNROLL_MAX:
        # Short trip count: static unroll with static slices (no loop overhead;
        # x value + acc + temps stay well under the 64-vreg file).
        x = x_ref[...]                           # (bt, dt), <= 8-16 vregs
        for d in range(dt):
            acc = acc + contribution(x[:, d:d + 1],
                                     shifts_ref[d:d + 1, :],
                                     weights_ref[d:d + 1, :],
                                     w_inv2_ref[d:d + 1, :])
    else:
        # Long D-chunk: fori_loop bounds live ranges (~16-24 vregs, no spills);
        # the x column is loaded from the ref inside the body.
        def body(d, acc):
            return acc + contribution(x_ref[:, pl.ds(d, 1)],
                                      shifts_ref[pl.ds(d, 1), :],
                                      weights_ref[pl.ds(d, 1), :],
                                      w_inv2_ref[pl.ds(d, 1), :])

        acc = lax.fori_loop(0, dt, body, acc, unroll=8)

    o_ref[...] = acc


def wavelet_layer(x, scales, shifts, weights, *, batch_tile=128, d_tile=256):
    """Pallas implementation of WaveletLayer.forward.

    x:       (batch, input_dim)      float32
    scales:  (n_wavelets,)           float32
    shifts:  (input_dim, n_wavelets) float32
    weights: (input_dim, n_wavelets) float32
    returns: (batch, n_wavelets)     float32
    """
    x = jnp.asarray(x, jnp.float32)
    scales = jnp.asarray(scales, jnp.float32)
    shifts = jnp.asarray(shifts, jnp.float32)
    weights = jnp.asarray(weights, jnp.float32)

    batch, input_dim = x.shape
    n_wavelets = scales.shape[0]

    # ---- geometry --------------------------------------------------------
    wt = _W_TILE
    wp = _round_up(n_wavelets, wt)
    nw = wp // wt

    if input_dim <= _STATIC_UNROLL_MAX:
        dt = input_dim                    # full D in one (statically unrolled) chunk
        d_pad = input_dim
    else:
        dt = min(_round_up(d_tile, 128), _round_up(input_dim, 128))
        d_pad = _round_up(input_dim, dt)
    nd = d_pad // dt

    bt = _round_up(min(batch_tile, _round_up(batch, 8)), 8)
    # v7x has 2 TensorCores: make sure the "parallel" axes span >= 2 blocks.
    if nw < 2 and batch >= 16 and _round_up(batch, bt) // bt < 2:
        bt = _round_up((batch + 1) // 2, 8)
    b_pad = _round_up(batch, bt)
    nb = b_pad // bt

    # ---- one-off preprocessing (O(W) / O(D*W), plain XLA) -----------------
    inv = 1.0 / (scales + 1e-8)
    inv2 = inv * inv
    c2 = _NEG_HALF_LOG2E * inv2                       # exp(-t/2) == exp2(c2*d2)
    w_inv2 = weights * inv2[None, :]

    # Zero padding everywhere (see invariant note at the top of the file).
    c2_p = jnp.zeros((1, wp), jnp.float32).at[0, :n_wavelets].set(c2)
    shifts_p = jnp.zeros((d_pad, wp), jnp.float32).at[:input_dim, :n_wavelets].set(shifts)
    weights_p = jnp.zeros((d_pad, wp), jnp.float32).at[:input_dim, :n_wavelets].set(weights)
    w_inv2_p = jnp.zeros((d_pad, wp), jnp.float32).at[:input_dim, :n_wavelets].set(w_inv2)
    x_p = jnp.zeros((b_pad, d_pad), jnp.float32).at[:batch, :input_dim].set(x)

    grid = (nb, nw, nd)

    # Advisory cost; bytes include the nw-fold x re-fetch and nb-fold
    # parameter-table re-fetch implied by the tiling.
    cost = pl.CostEstimate(
        flops=int(7 * batch * n_wavelets * input_dim),
        transcendentals=int(batch * n_wavelets * input_dim),
        bytes_accessed=int(4 * (nw * b_pad * d_pad          # x, once per W block
                                + nb * 3 * d_pad * wp       # shifts/weights/w_inv2
                                + nb * nd * wp               # c2
                                + b_pad * wp)),              # output writeback
    )

    out_p = pl.pallas_call(
        wavelet_kernel,
        out_shape=jax.ShapeDtypeStruct((b_pad, wp), jnp.float32),
        grid_spec=pltpu.PrefetchScalarGridSpec(
            num_scalar_prefetch=0,
            grid=grid,
            in_specs=[
                pl.BlockSpec((bt, dt), lambda b, w, d: (b, d)),   # x
                pl.BlockSpec((dt, wt), lambda b, w, d: (d, w)),   # shifts
                pl.BlockSpec((dt, wt), lambda b, w, d: (d, w)),   # weights
                pl.BlockSpec((dt, wt), lambda b, w, d: (d, w)),   # weights * inv^2
                pl.BlockSpec((1, wt), lambda b, w, d: (0, w)),    # c2
            ],
            out_specs=pl.BlockSpec((bt, wt), lambda b, w, d: (b, w)),
        ),
        compiler_params=pltpu.CompilerParams(
            # batch / W blocks shard across TensorCores; the D reduction axis
            # is last and sequential (output block resident across it).
            # Per-step blocks are <~1 MiB, so the default scoped-VMEM limit is
            # fine on every generation, including v7x (64 MiB physical).
            dimension_semantics=("parallel", "parallel", "arbitrary"),
        ),
        cost_estimate=cost,
    )(x_p, shifts_p, weights_p, w_inv2_p, c2_p)

    return out_p[:batch, :n_wavelets]


def wavelet_layer_ref(x, scales, shifts, weights):
    """Pure-JAX reference (faithful, vectorized PyTorch loop)."""
    scaled = (x[:, :, None] - shifts[None, :, :]) / (scales[None, None, :] + 1e-8)
    wv = (1.0 - scaled ** 2) * jnp.exp(-0.5 * scaled ** 2)
    return jnp.sum(wv * weights[None, :, :], axis=1)  # (B, W)


def _init_params(key, input_dim, n_wavelets):
    # Matches the PyTorch __init__ distributions:
    #   scales  = rand(n_wavelets) * 0.5 + 0.5
    #   shifts  = randn(input_dim, n_wavelets)
    #   weights = randn(input_dim, n_wavelets) * 0.1
    k_s, k_sh, k_w = jax.random.split(key, 3)
    scales = jax.random.uniform(k_s, (n_wavelets,), jnp.float32) * 0.5 + 0.5
    shifts = jax.random.normal(k_sh, (input_dim, n_wavelets), jnp.float32)
    weights = jax.random.normal(k_w, (input_dim, n_wavelets), jnp.float32) * 0.1
    return scales, shifts, weights


if __name__ == "__main__":
    key = jax.random.PRNGKey(0)
    k1, k2, kx1, kx2 = jax.random.split(key, 4)

    # --- Case 1: module-default small shapes (PINN-style) ------------------
    batch, input_dim, n_wavelets = 2, 32, 12
    scales, shifts, weights = _init_params(k1, input_dim, n_wavelets)
    x = jax.random.normal(kx1, (batch, input_dim), jnp.float32)

    out = jax.block_until_ready(wavelet_layer(x, scales, shifts, weights))
    ref = wavelet_layer_ref(x, scales, shifts, weights)
    assert out.shape == (batch, n_wavelets)
    assert jnp.allclose(out, ref, atol=2e-5, rtol=2e-5), (out, ref)

    # --- Case 2: exercises W-grid tiling (2 lane blocks), batch tiling,
    #             and padded W/batch correctness -----------------------------
    batch, input_dim, n_wavelets = 96, 8, 150
    scales, shifts, weights = _init_params(k2, input_dim, n_wavelets)
    x = jax.random.normal(kx2, (batch, input_dim), jnp.float32)

    out = jax.block_until_ready(
        wavelet_layer(x, scales, shifts, weights, batch_tile=64))
    ref = wavelet_layer_ref(x, scales, shifts, weights)
    assert out.shape == (batch, n_wavelets)
    assert jnp.allclose(out, ref, atol=2e-5, rtol=2e-5), (out, ref)

    print("KERNEL_OK")
</pallas_src>

<mosaic_0001>
module attributes {stable_mosaic.version = 11 : i64} {
  func.func @wavelet_kernel(%arg0: i32, %arg1: i32, %arg2: i32, %arg3: memref<8x32xf32, #tpu.memory_space<vmem>>, %arg4: memref<32x128xf32, #tpu.memory_space<vmem>>, %arg5: memref<32x128xf32, #tpu.memory_space<vmem>>, %arg6: memref<32x128xf32, #tpu.memory_space<vmem>>, %arg7: memref<1x128xf32, #tpu.memory_space<vmem>>, %arg8: memref<8x128xf32, #tpu.memory_space<vmem>>) attributes {dimension_semantics = [#tpu.dimension_semantics<parallel>, #tpu.dimension_semantics<parallel>, #tpu.dimension_semantics<arbitrary>], iteration_bounds = array<i64: 1, 1, 1>, scalar_prefetch = 0 : i64, scratch_operands = 0 : i64, tpu.core_type = #tpu.core_type<tc>, window_params = [{transform_indices = @transform_0, window_bounds = array<i64: 8, 32>}, {transform_indices = @transform_1, window_bounds = array<i64: 32, 128>}, {transform_indices = @transform_2, window_bounds = array<i64: 32, 128>}, {transform_indices = @transform_3, window_bounds = array<i64: 32, 128>}, {transform_indices = @transform_4, window_bounds = array<i64: 1, 128>}, {transform_indices = @transform_5, window_bounds = array<i64: 8, 128>}]} {
    %c0_i32 = arith.constant 0 : i32
    %0 = arith.cmpi eq, %arg2, %c0_i32 : i32
    %1 = arith.extui %0 : i1 to i32
    %c0_i32_0 = arith.constant 0 : i32
    %2 = arith.cmpi ne, %1, %c0_i32_0 : i32
    scf.if %2 {
      %cst = arith.constant 0.000000e+00 : f32
      %551 = vector.broadcast %cst : f32 to vector<8x128xf32>
      %c0_169 = arith.constant 0 : index
      %c0_170 = arith.constant 0 : index
      %552 = vector.load %arg8[%c0_169, %c0_170] : memref<8x128xf32, #tpu.memory_space<vmem>>, vector<8x128xf32>
      tpu.vector_store %arg8[%c0_169, %c0_170], %551 {strides = array<i32>} : memref<8x128xf32, #tpu.memory_space<vmem>>, vector<8x128xf32>,
    } else {
    }
    %c0 = arith.constant 0 : index
    %c0_1 = arith.constant 0 : index
    %3 = vector.load %arg7[%c0, %c0_1] : memref<1x128xf32, #tpu.memory_space<vmem>>, vector<1x128xf32>
    %c0_2 = arith.constant 0 : index
    %c0_3 = arith.constant 0 : index
    %4 = vector.load %arg8[%c0_2, %c0_3] : memref<8x128xf32, #tpu.memory_space<vmem>>, vector<8x128xf32>
    %c0_4 = arith.constant 0 : index
    %c0_5 = arith.constant 0 : index
    %5 = vector.load %arg3[%c0_4, %c0_5] : memref<8x32xf32, #tpu.memory_space<vmem>>, vector<8x32xf32>
    %6 = vector.extract_strided_slice %5 {offsets = [0, 0], sizes = [8, 1], strides = [1, 1]} : vector<8x32xf32> to vector<8x1xf32>
    %c0_6 = arith.constant 0 : index
    %c0_7 = arith.constant 0 : index
    %7 = vector.load %arg4[%c0_6, %c0_7] : memref<32x128xf32, #tpu.memory_space<vmem>>, vector<1x128xf32>
    %c0_8 = arith.constant 0 : index
    %c0_9 = arith.constant 0 : index
    %8 = vector.load %arg5[%c0_8, %c0_9] : memref<32x128xf32, #tpu.memory_space<vmem>>, vector<1x128xf32>
    %c0_10 = arith.constant 0 : index
    %c0_11 = arith.constant 0 : index
    %9 = vector.load %arg6[%c0_10, %c0_11] : memref<32x128xf32, #tpu.memory_space<vmem>>, vector<1x128xf32>
    %10 = vector.broadcast %6 : vector<8x1xf32> to vector<8x128xf32>
    %11 = vector.broadcast %7 : vector<1x128xf32> to vector<8x128xf32>
    %12 = arith.subf %10, %11 : vector<8x128xf32>
    %13 = arith.mulf %12, %12 : vector<8x128xf32>
    %14 = vector.broadcast %9 : vector<1x128xf32> to vector<8x128xf32>
    %15 = arith.mulf %14, %13 : vector<8x128xf32>
    %16 = vector.broadcast %8 : vector<1x128xf32> to vector<8x128xf32>
    %17 = arith.subf %16, %15 : vector<8x128xf32>
    %18 = vector.broadcast %3 : vector<1x128xf32> to vector<8x128xf32>
    %19 = arith.mulf %18, %13 : vector<8x128xf32>
    %20 = math.exp2 %19 : vector<8x128xf32>
    %21 = arith.mulf %17, %20 : vector<8x128xf32>
    %22 = arith.addf %4, %21 : vector<8x128xf32>
    %23 = vector.extract_strided_slice %5 {offsets = [0, 1], sizes = [8, 1], strides = [1, 1]} : vector<8x32xf32> to vector<8x1xf32>
    %c1 = arith.constant 1 : index
    %c0_12 = arith.constant 0 : index
    %24 = vector.load %arg4[%c1, %c0_12] : memref<32x128xf32, #tpu.memory_space<vmem>>, vector<1x128xf32>
    %c1_13 = arith.constant 1 : index
    %c0_14 = arith.constant 0 : index
    %25 = vector.load %arg5[%c1_13, %c0_14] : memref<32x128xf32, #tpu.memory_space<vmem>>, vector<1x128xf32>
    %c1_15 = arith.constant 1 : index
    %c0_16 = arith.constant 0 : index
    %26 = vector.load %arg6[%c1_15, %c0_16] : memref<32x128xf32, #tpu.memory_space<vmem>>, vector<1x128xf32>
    %27 = vector.broadcast %23 : vector<8x1xf32> to vector<8x128xf32>
    %28 = vector.broadcast %24 : vector<1x128xf32> to vector<8x128xf32>
    %29 = arith.subf %27, %28 : vector<8x128xf32>
    %30 = arith.mulf %29, %29 : vector<8x128xf32>
    %31 = vector.broadcast %26 : vector<1x128xf32> to vector<8x128xf32>
    %32 = arith.mulf %31, %30 : vector<8x128xf32>
    %33 = vector.broadcast %25 : vector<1x128xf32> to vector<8x128xf32>
    %34 = arith.subf %33, %32 : vector<8x128xf32>
    %35 = vector.broadcast %3 : vector<1x128xf32> to vector<8x128xf32>
    %36 = arith.mulf %35, %30 : vector<8x128xf32>
    %37 = math.exp2 %36 : vector<8x128xf32>
    %38 = arith.mulf %34, %37 : vector<8x128xf32>
    %39 = arith.addf %22, %38 : vector<8x128xf32>
    %40 = vector.extract_strided_slice %5 {offsets = [0, 2], sizes = [8, 1], strides = [1, 1]} : vector<8x32xf32> to vector<8x1xf32>
    %c2 = arith.constant 2 : index
    %c0_17 = arith.constant 0 : index
    %41 = vector.load %arg4[%c2, %c0_17] : memref<32x128xf32, #tpu.memory_space<vmem>>, vector<1x128xf32>
    %c2_18 = arith.constant 2 : index
    %c0_19 = arith.constant 0 : index
    %42 = vector.load %arg5[%c2_18, %c0_19] : memref<32x128xf32, #tpu.memory_space<vmem>>, vector<1x128xf32>
    %c2_20 = arith.constant 2 : index
    %c0_21 = arith.constant 0 : index
    %43 = vector.load %arg6[%c2_20, %c0_21] : memref<32x128xf32, #tpu.memory_space<vmem>>, vector<1x128xf32>
    %44 = vector.broadcast %40 : vector<8x1xf32> to vector<8x128xf32>
    %45 = vector.broadcast %41 : vector<1x128xf32> to vector<8x128xf32>
    %46 = arith.subf %44, %45 : vector<8x128xf32>
    %47 = arith.mulf %46, %46 : vector<8x128xf32>
    %48 = vector.broadcast %43 : vector<1x128xf32> to vector<8x128xf32>
    %49 = arith.mulf %48, %47 : vector<8x128xf32>
    %50 = vector.broadcast %42 : vector<1x128xf32> to vector<8x128xf32>
    %51 = arith.subf %50, %49 : vector<8x128xf32>
    %52 = vector.broadcast %3 : vector<1x128xf32> to vector<8x128xf32>
    %53 = arith.mulf %52, %47 : vector<8x128xf32>
    %54 = math.exp2 %53 : vector<8x128xf32>
    %55 = arith.mulf %51, %54 : vector<8x128xf32>
    %56 = arith.addf %39, %55 : vector<8x128xf32>
    %57 = vector.extract_strided_slice %5 {offsets = [0, 3], sizes = [8, 1], strides = [1, 1]} : vector<8x32xf32> to vector<8x1xf32>
    %c3 = arith.constant 3 : index
    %c0_22 = arith.constant 0 : index
    %58 = vector.load %arg4[%c3, %c0_22] : memref<32x128xf32, #tpu.memory_space<vmem>>, vector<1x128xf32>
    %c3_23 = arith.constant 3 : index
    %c0_24 = arith.constant 0 : index
    %59 = vector.load %arg5[%c3_23, %c0_24] : memref<32x128xf32, #tpu.memory_space<vmem>>, vector<1x128xf32>
    %c3_25 = arith.constant 3 : index
    %c0_26 = arith.constant 0 : index
    %60 = vector.load %arg6[%c3_25, %c0_26] : memref<32x128xf32, #tpu.memory_space<vmem>>, vector<1x128xf32>
    %61 = vector.broadcast %57 : vector<8x1xf32> to vector<8x128xf32>
    %62 = vector.broadcast %58 : vector<1x128xf32> to vector<8x128xf32>
    %63 = arith.subf %61, %62 : vector<8x128xf32>
    %64 = arith.mulf %63, %63 : vector<8x128xf32>
    %65 = vector.broadcast %60 : vector<1x128xf32> to vector<8x128xf32>
    %66 = arith.mulf %65, %64 : vector<8x128xf32>
    %67 = vector.broadcast %59 : vector<1x128xf32> to vector<8x128xf32>
    %68 = arith.subf %67, %66 : vector<8x128xf32>
    %69 = vector.broadcast %3 : vector<1x128xf32> to vector<8x128xf32>
    %70 = arith.mulf %69, %64 : vector<8x128xf32>
    %71 = math.exp2 %70 : vector<8x128xf32>
    %72 = arith.mulf %68, %71 : vector<8x128xf32>
    %73 = arith.addf %56, %72 : vector<8x128xf32>
    %74 = vector.extract_strided_slice %5 {offsets = [0, 4], sizes = [8, 1], strides = [1, 1]} : vector<8x32xf32> to vector<8x1xf32>
    %c4 = arith.constant 4 : index
    %c0_27 = arith.constant 0 : index
    %75 = vector.load %arg4[%c4, %c0_27] : memref<32x128xf32, #tpu.memory_space<vmem>>, vector<1x128xf32>
    %c4_28 = arith.constant 4 : index
    %c0_29 = arith.constant 0 : index
    %76 = vector.load %arg5[%c4_28, %c0_29] : memref<32x128xf32, #tpu.memory_space<vmem>>, vector<1x128xf32>
    %c4_30 = arith.constant 4 : index
    %c0_31 = arith.constant 0 : index
    %77 = vector.load %arg6[%c4_30, %c0_31] : memref<32x128xf32, #tpu.memory_space<vmem>>, vector<1x128xf32>
    %78 = vector.broadcast %74 : vector<8x1xf32> to vector<8x128xf32>
    %79 = vector.broadcast %75 : vector<1x128xf32> to vector<8x128xf32>
    %80 = arith.subf %78, %79 : vector<8x128xf32>
    %81 = arith.mulf %80, %80 : vector<8x128xf32>
    %82 = vector.broadcast %77 : vector<1x128xf32> to vector<8x128xf32>
    %83 = arith.mulf %82, %81 : vector<8x128xf32>
    %84 = vector.broadcast %76 : vector<1x128xf32> to vector<8x128xf32>
    %85 = arith.subf %84, %83 : vector<8x128xf32>
    %86 = vector.broadcast %3 : vector<1x128xf32> to vector<8x128xf32>
    %87 = arith.mulf %86, %81 : vector<8x128xf32>
    %88 = math.exp2 %87 : vector<8x128xf32>
    %89 = arith.mulf %85, %88 : vector<8x128xf32>
    %90 = arith.addf %73, %89 : vector<8x128xf32>
    %91 = vector.extract_strided_slice %5 {offsets = [0, 5], sizes = [8, 1], strides = [1, 1]} : vector<8x32xf32> to vector<8x1xf32>
    %c5 = arith.constant 5 : index
    %c0_32 = arith.constant 0 : index
    %92 = vector.load %arg4[%c5, %c0_32] : memref<32x128xf32, #tpu.memory_space<vmem>>, vector<1x128xf32>
    %c5_33 = arith.constant 5 : index
    %c0_34 = arith.constant 0 : index
    %93 = vector.load %arg5[%c5_33, %c0_34] : memref<32x128xf32, #tpu.memory_space<vmem>>, vector<1x128xf32>
    %c5_35 = arith.constant 5 : index
    %c0_36 = arith.constant 0 : index
    %94 = vector.load %arg6[%c5_35, %c0_36] : memref<32x128xf32, #tpu.memory_space<vmem>>, vector<1x128xf32>
    %95 = vector.broadcast %91 : vector<8x1xf32> to vector<8x128xf32>
    %96 = vector.broadcast %92 : vector<1x128xf32> to vector<8x128xf32>
    %97 = arith.subf %95, %96 : vector<8x128xf32>
    %98 = arith.mulf %97, %97 : vector<8x128xf32>
    %99 = vector.broadcast %94 : vector<1x128xf32> to vector<8x128xf32>
    %100 = arith.mulf %99, %98 : vector<8x128xf32>
    %101 = vector.broadcast %93 : vector<1x128xf32> to vector<8x128xf32>
    %102 = arith.subf %101, %100 : vector<8x128xf32>
    %103 = vector.broadcast %3 : vector<1x128xf32> to vector<8x128xf32>
    %104 = arith.mulf %103, %98 : vector<8x128xf32>
    %105 = math.exp2 %104 : vector<8x128xf32>
    %106 = arith.mulf %102, %105 : vector<8x128xf32>
    %107 = arith.addf %90, %106 : vector<8x128xf32>
    %108 = vector.extract_strided_slice %5 {offsets = [0, 6], sizes = [8, 1], strides = [1, 1]} : vector<8x32xf32> to vector<8x1xf32>
    %c6 = arith.constant 6 : index
    %c0_37 = arith.constant 0 : index
    %109 = vector.load %arg4[%c6, %c0_37] : memref<32x128xf32, #tpu.memory_space<vmem>>, vector<1x128xf32>
    %c6_38 = arith.constant 6 : index
    %c0_39 = arith.constant 0 : index
    %110 = vector.load %arg5[%c6_38, %c0_39] : memref<32x128xf32, #tpu.memory_space<vmem>>, vector<1x128xf32>
    %c6_40 = arith.constant 6 : index
    %c0_41 = arith.constant 0 : index
    %111 = vector.load %arg6[%c6_40, %c0_41] : memref<32x128xf32, #tpu.memory_space<vmem>>, vector<1x128xf32>
    %112 = vector.broadcast %108 : vector<8x1xf32> to vector<8x128xf32>
    %113 = vector.broadcast %109 : vector<1x128xf32> to vector<8x128xf32>
    %114 = arith.subf %112, %113 : vector<8x128xf32>
    %115 = arith.mulf %114, %114 : vector<8x128xf32>
    %116 = vector.broadcast %111 : vector<1x128xf32> to vector<8x128xf32>
    %117 = arith.mulf %116, %115 : vector<8x128xf32>
    %118 = vector.broadcast %110 : vector<1x128xf32> to vector<8x128xf32>
    %119 = arith.subf %118, %117 : vector<8x128xf32>
    %120 = vector.broadcast %3 : vector<1x128xf32> to vector<8x128xf32>
    %121 = arith.mulf %120, %115 : vector<8x128xf32>
    %122 = math.exp2 %121 : vector<8x128xf32>
    %123 = arith.mulf %119, %122 : vector<8x128xf32>
    %124 = arith.addf %107, %123 : vector<8x128xf32>
    %125 = vector.extract_strided_slice %5 {offsets = [0, 7], sizes = [8, 1], strides = [1, 1]} : vector<8x32xf32> to vector<8x1xf32>
    %c7 = arith.constant 7 : index
    %c0_42 = arith.constant 0 : index
    %126 = vector.load %arg4[%c7, %c0_42] : memref<32x128xf32, #tpu.memory_space<vmem>>, vector<1x128xf32>
    %c7_43 = arith.constant 7 : index
    %c0_44 = arith.constant 0 : index
    %127 = vector.load %arg5[%c7_43, %c0_44] : memref<32x128xf32, #tpu.memory_space<vmem>>, vector<1x128xf32>
    %c7_45 = arith.constant 7 : index
    %c0_46 = arith.constant 0 : index
    %128 = vector.load %arg6[%c7_45, %c0_46] : memref<32x128xf32, #tpu.memory_space<vmem>>, vector<1x128xf32>
    %129 = vector.broadcast %125 : vector<8x1xf32> to vector<8x128xf32>
    %130 = vector.broadcast %126 : vector<1x128xf32> to vector<8x128xf32>
    %131 = arith.subf %129, %130 : vector<8x128xf32>
    %132 = arith.mulf %131, %131 : vector<8x128xf32>
    %133 = vector.broadcast %128 : vector<1x128xf32> to vector<8x128xf32>
    %134 = arith.mulf %133, %132 : vector<8x128xf32>
    %135 = vector.broadcast %127 : vector<1x128xf32> to vector<8x128xf32>
    %136 = arith.subf %135, %134 : vector<8x128xf32>
    %137 = vector.broadcast %3 : vector<1x128xf32> to vector<8x128xf32>
    %138 = arith.mulf %137, %132 : vector<8x128xf32>
    %139 = math.exp2 %138 : vector<8x128xf32>
    %140 = arith.mulf %136, %139 : vector<8x128xf32>
    %141 = arith.addf %124, %140 : vector<8x128xf32>
    %142 = vector.extract_strided_slice %5 {offsets = [0, 8], sizes = [8, 1], strides = [1, 1]} : vector<8x32xf32> to vector<8x1xf32>
    %c8 = arith.constant 8 : index
    %c0_47 = arith.constant 0 : index
    %143 = vector.load %arg4[%c8, %c0_47] : memref<32x128xf32, #tpu.memory_space<vmem>>, vector<1x128xf32>
    %c8_48 = arith.constant 8 : index
    %c0_49 = arith.constant 0 : index
    %144 = vector.load %arg5[%c8_48, %c0_49] : memref<32x128xf32, #tpu.memory_space<vmem>>, vector<1x128xf32>
    %c8_50 = arith.constant 8 : index
    %c0_51 = arith.constant 0 : index
    %145 = vector.load %arg6[%c8_50, %c0_51] : memref<32x128xf32, #tpu.memory_space<vmem>>, vector<1x128xf32>
    %146 = vector.broadcast %142 : vector<8x1xf32> to vector<8x128xf32>
    %147 = vector.broadcast %143 : vector<1x128xf32> to vector<8x128xf32>
    %148 = arith.subf %146, %147 : vector<8x128xf32>
    %149 = arith.mulf %148, %148 : vector<8x128xf32>
    %150 = vector.broadcast %145 : vector<1x128xf32> to vector<8x128xf32>
    %151 = arith.mulf %150, %149 : vector<8x128xf32>
    %152 = vector.broadcast %144 : vector<1x128xf32> to vector<8x128xf32>
    %153 = arith.subf %152, %151 : vector<8x128xf32>
    %154 = vector.broadcast %3 : vector<1x128xf32> to vector<8x128xf32>
    %155 = arith.mulf %154, %149 : vector<8x128xf32>
    %156 = math.exp2 %155 : vector<8x128xf32>
    %157 = arith.mulf %153, %156 : vector<8x128xf32>
    %158 = arith.addf %141, %157 : vector<8x128xf32>
    %159 = vector.extract_strided_slice %5 {offsets = [0, 9], sizes = [8, 1], strides = [1, 1]} : vector<8x32xf32> to vector<8x1xf32>
    %c9 = arith.constant 9 : index
    %c0_52 = arith.constant 0 : index
    %160 = vector.load %arg4[%c9, %c0_52] : memref<32x128xf32, #tpu.memory_space<vmem>>, vector<1x128xf32>
    %c9_53 = arith.constant 9 : index
    %c0_54 = arith.constant 0 : index
    %161 = vector.load %arg5[%c9_53, %c0_54] : memref<32x128xf32, #tpu.memory_space<vmem>>, vector<1x128xf32>
    %c9_55 = arith.constant 9 : index
    %c0_56 = arith.constant 0 : index
    %162 = vector.load %arg6[%c9_55, %c0_56] : memref<32x128xf32, #tpu.memory_space<vmem>>, vector<1x128xf32>
    %163 = vector.broadcast %159 : vector<8x1xf32> to vector<8x128xf32>
    %164 = vector.broadcast %160 : vector<1x128xf32> to vector<8x128xf32>
    %165 = arith.subf %163, %164 : vector<8x128xf32>
    %166 = arith.mulf %165, %165 : vector<8x128xf32>
    %167 = vector.broadcast %162 : vector<1x128xf32> to vector<8x128xf32>
    %168 = arith.mulf %167, %166 : vector<8x128xf32>
    %169 = vector.broadcast %161 : vector<1x128xf32> to vector<8x128xf32>
    %170 = arith.subf %169, %168 : vector<8x128xf32>
    %171 = vector.broadcast %3 : vector<1x128xf32> to vector<8x128xf32>
    %172 = arith.mulf %171, %166 : vector<8x128xf32>
    %173 = math.exp2 %172 : vector<8x128xf32>
    %174 = arith.mulf %170, %173 : vector<8x128xf32>
    %175 = arith.addf %158, %174 : vector<8x128xf32>
    %176 = vector.extract_strided_slice %5 {offsets = [0, 10], sizes = [8, 1], strides = [1, 1]} : vector<8x32xf32> to vector<8x1xf32>
    %c10 = arith.constant 10 : index
    %c0_57 = arith.constant 0 : index
    %177 = vector.load %arg4[%c10, %c0_57] : memref<32x128xf32, #tpu.memory_space<vmem>>, vector<1x128xf32>
    %c10_58 = arith.constant 10 : index
    %c0_59 = arith.constant 0 : index
    %178 = vector.load %arg5[%c10_58, %c0_59] : memref<32x128xf32, #tpu.memory_space<vmem>>, vector<1x128xf32>
    %c10_60 = arith.constant 10 : index
    %c0_61 = arith.constant 0 : index
    %179 = vector.load %arg6[%c10_60, %c0_61] : memref<32x128xf32, #tpu.memory_space<vmem>>, vector<1x128xf32>
    %180 = vector.broadcast %176 : vector<8x1xf32> to vector<8x128xf32>
    %181 = vector.broadcast %177 : vector<1x128xf32> to vector<8x128xf32>
    %182 = arith.subf %180, %181 : vector<8x128xf32>
    %183 = arith.mulf %182, %182 : vector<8x128xf32>
    %184 = vector.broadcast %179 : vector<1x128xf32> to vector<8x128xf32>
    %185 = arith.mulf %184, %183 : vector<8x128xf32>
    %186 = vector.broadcast %178 : vector<1x128xf32> to vector<8x128xf32>
    %187 = arith.subf %186, %185 : vector<8x128xf32>
    %188 = vector.broadcast %3 : vector<1x128xf32> to vector<8x128xf32>
    %189 = arith.mulf %188, %183 : vector<8x128xf32>
    %190 = math.exp2 %189 : vector<8x128xf32>
    %191 = arith.mulf %187, %190 : vector<8x128xf32>
    %192 = arith.addf %175, %191 : vector<8x128xf32>
    %193 = vector.extract_strided_slice %5 {offsets = [0, 11], sizes = [8, 1], strides = [1, 1]} : vector<8x32xf32> to vector<8x1xf32>
    %c11 = arith.constant 11 : index
    %c0_62 = arith.constant 0 : index
    %194 = vector.load %arg4[%c11, %c0_62] : memref<32x128xf32, #tpu.memory_space<vmem>>, vector<1x128xf32>
    %c11_63 = arith.constant 11 : index
    %c0_64 = arith.constant 0 : index
    %195 = vector.load %arg5[%c11_63, %c0_64] : memref<32x128xf32, #tpu.memory_space<vmem>>, vector<1x128xf32>
    %c11_65 = arith.constant 11 : index
    %c0_66 = arith.constant 0 : index
    %196 = vector.load %arg6[%c11_65, %c0_66] : memref<32x128xf32, #tpu.memory_space<vmem>>, vector<1x128xf32>
    %197 = vector.broadcast %193 : vector<8x1xf32> to vector<8x128xf32>
    %198 = vector.broadcast %194 : vector<1x128xf32> to vector<8x128xf32>
    %199 = arith.subf %197, %198 : vector<8x128xf32>
    %200 = arith.mulf %199, %199 : vector<8x128xf32>
    %201 = vector.broadcast %196 : vector<1x128xf32> to vector<8x128xf32>
    %202 = arith.mulf %201, %200 : vector<8x128xf32>
    %203 = vector.broadcast %195 : vector<1x128xf32> to vector<8x128xf32>
    %204 = arith.subf %203, %202 : vector<8x128xf32>
    %205 = vector.broadcast %3 : vector<1x128xf32> to vector<8x128xf32>
    %206 = arith.mulf %205, %200 : vector<8x128xf32>
    %207 = math.exp2 %206 : vector<8x128xf32>
    %208 = arith.mulf %204, %207 : vector<8x128xf32>
    %209 = arith.addf %192, %208 : vector<8x128xf32>
    %210 = vector.extract_strided_slice %5 {offsets = [0, 12], sizes = [8, 1], strides = [1, 1]} : vector<8x32xf32> to vector<8x1xf32>
    %c12 = arith.constant 12 : index
    %c0_67 = arith.constant 0 : index
    %211 = vector.load %arg4[%c12, %c0_67] : memref<32x128xf32, #tpu.memory_space<vmem>>, vector<1x128xf32>
    %c12_68 = arith.constant 12 : index
    %c0_69 = arith.constant 0 : index
    %212 = vector.load %arg5[%c12_68, %c0_69] : memref<32x128xf32, #tpu.memory_space<vmem>>, vector<1x128xf32>
    %c12_70 = arith.constant 12 : index
    %c0_71 = arith.constant 0 : index
    %213 = vector.load %arg6[%c12_70, %c0_71] : memref<32x128xf32, #tpu.memory_space<vmem>>, vector<1x128xf32>
    %214 = vector.broadcast %210 : vector<8x1xf32> to vector<8x128xf32>
    %215 = vector.broadcast %211 : vector<1x128xf32> to vector<8x128xf32>
    %216 = arith.subf %214, %215 : vector<8x128xf32>
    %217 = arith.mulf %216, %216 : vector<8x128xf32>
    %218 = vector.broadcast %213 : vector<1x128xf32> to vector<8x128xf32>
    %219 = arith.mulf %218, %217 : vector<8x128xf32>
    %220 = vector.broadcast %212 : vector<1x128xf32> to vector<8x128xf32>
    %221 = arith.subf %220, %219 : vector<8x128xf32>
    %222 = vector.broadcast %3 : vector<1x128xf32> to vector<8x128xf32>
    %223 = arith.mulf %222, %217 : vector<8x128xf32>
    %224 = math.exp2 %223 : vector<8x128xf32>
    %225 = arith.mulf %221, %224 : vector<8x128xf32>
    %226 = arith.addf %209, %225 : vector<8x128xf32>
    %227 = vector.extract_strided_slice %5 {offsets = [0, 13], sizes = [8, 1], strides = [1, 1]} : vector<8x32xf32> to vector<8x1xf32>
    %c13 = arith.constant 13 : index
    %c0_72 = arith.constant 0 : index
    %228 = vector.load %arg4[%c13, %c0_72] : memref<32x128xf32, #tpu.memory_space<vmem>>, vector<1x128xf32>
    %c13_73 = arith.constant 13 : index
    %c0_74 = arith.constant 0 : index
    %229 = vector.load %arg5[%c13_73, %c0_74] : memref<32x128xf32, #tpu.memory_space<vmem>>, vector<1x128xf32>
    %c13_75 = arith.constant 13 : index
    %c0_76 = arith.constant 0 : index
    %230 = vector.load %arg6[%c13_75, %c0_76] : memref<32x128xf32, #tpu.memory_space<vmem>>, vector<1x128xf32>
    %231 = vector.broadcast %227 : vector<8x1xf32> to vector<8x128xf32>
    %232 = vector.broadcast %228 : vector<1x128xf32> to vector<8x128xf32>
    %233 = arith.subf %231, %232 : vector<8x128xf32>
    %234 = arith.mulf %233, %233 : vector<8x128xf32>
    %235 = vector.broadcast %230 : vector<1x128xf32> to vector<8x128xf32>
    %236 = arith.mulf %235, %234 : vector<8x128xf32>
    %237 = vector.broadcast %229 : vector<1x128xf32> to vector<8x128xf32>
    %238 = arith.subf %237, %236 : vector<8x128xf32>
    %239 = vector.broadcast %3 : vector<1x128xf32> to vector<8x128xf32>
    %240 = arith.mulf %239, %234 : vector<8x128xf32>
    %241 = math.exp2 %240 : vector<8x128xf32>
    %242 = arith.mulf %238, %241 : vector<8x128xf32>
    %243 = arith.addf %226, %242 : vector<8x128xf32>
    %244 = vector.extract_strided_slice %5 {offsets = [0, 14], sizes = [8, 1], strides = [1, 1]} : vector<8x32xf32> to vector<8x1xf32>
    %c14 = arith.constant 14 : index
    %c0_77 = arith.constant 0 : index
    %245 = vector.load %arg4[%c14, %c0_77] : memref<32x128xf32, #tpu.memory_space<vmem>>, vector<1x128xf32>
    %c14_78 = arith.constant 14 : index
    %c0_79 = arith.constant 0 : index
    %246 = vector.load %arg5[%c14_78, %c0_79] : memref<32x128xf32, #tpu.memory_space<vmem>>, vector<1x128xf32>
    %c14_80 = arith.constant 14 : index
    %c0_81 = arith.constant 0 : index
    %247 = vector.load %arg6[%c14_80, %c0_81] : memref<32x128xf32, #tpu.memory_space<vmem>>, vector<1x128xf32>
    %248 = vector.broadcast %244 : vector<8x1xf32> to vector<8x128xf32>
    %249 = vector.broadcast %245 : vector<1x128xf32> to vector<8x128xf32>
    %250 = arith.subf %248, %249 : vector<8x128xf32>
    %251 = arith.mulf %250, %250 : vector<8x128xf32>
    %252 = vector.broadcast %247 : vector<1x128xf32> to vector<8x128xf32>
    %253 = arith.mulf %252, %251 : vector<8x128xf32>
    %254 = vector.broadcast %246 : vector<1x128xf32> to vector<8x128xf32>
    %255 = arith.subf %254, %253 : vector<8x128xf32>
    %256 = vector.broadcast %3 : vector<1x128xf32> to vector<8x128xf32>
    %257 = arith.mulf %256, %251 : vector<8x128xf32>
    %258 = math.exp2 %257 : vector<8x128xf32>
    %259 = arith.mulf %255, %258 : vector<8x128xf32>
    %260 = arith.addf %243, %259 : vector<8x128xf32>
    %261 = vector.extract_strided_slice %5 {offsets = [0, 15], sizes = [8, 1], strides = [1, 1]} : vector<8x32xf32> to vector<8x1xf32>
    %c15 = arith.constant 15 : index
    %c0_82 = arith.constant 0 : index
    %262 = vector.load %arg4[%c15, %c0_82] : memref<32x128xf32, #tpu.memory_space<vmem>>, vector<1x128xf32>
    %c15_83 = arith.constant 15 : index
    %c0_84 = arith.constant 0 : index
    %263 = vector.load %arg5[%c15_83, %c0_84] : memref<32x128xf32, #tpu.memory_space<vmem>>, vector<1x128xf32>
    %c15_85 = arith.constant 15 : index
    %c0_86 = arith.constant 0 : index
    %264 = vector.load %arg6[%c15_85, %c0_86] : memref<32x128xf32, #tpu.memory_space<vmem>>, vector<1x128xf32>
    %265 = vector.broadcast %261 : vector<8x1xf32> to vector<8x128xf32>
    %266 = vector.broadcast %262 : vector<1x128xf32> to vector<8x128xf32>
    %267 = arith.subf %265, %266 : vector<8x128xf32>
    %268 = arith.mulf %267, %267 : vector<8x128xf32>
    %269 = vector.broadcast %264 : vector<1x128xf32> to vector<8x128xf32>
    %270 = arith.mulf %269, %268 : vector<8x128xf32>
    %271 = vector.broadcast %263 : vector<1x128xf32> to vector<8x128xf32>
    %272 = arith.subf %271, %270 : vector<8x128xf32>
    %273 = vector.broadcast %3 : vector<1x128xf32> to vector<8x128xf32>
    %274 = arith.mulf %273, %268 : vector<8x128xf32>
    %275 = math.exp2 %274 : vector<8x128xf32>
    %276 = arith.mulf %272, %275 : vector<8x128xf32>
    %277 = arith.addf %260, %276 : vector<8x128xf32>
    %278 = vector.extract_strided_slice %5 {offsets = [0, 16], sizes = [8, 1], strides = [1, 1]} : vector<8x32xf32> to vector<8x1xf32>
    %c16 = arith.constant 16 : index
    %c0_87 = arith.constant 0 : index
    %279 = vector.load %arg4[%c16, %c0_87] : memref<32x128xf32, #tpu.memory_space<vmem>>, vector<1x128xf32>
    %c16_88 = arith.constant 16 : index
    %c0_89 = arith.constant 0 : index
    %280 = vector.load %arg5[%c16_88, %c0_89] : memref<32x128xf32, #tpu.memory_space<vmem>>, vector<1x128xf32>
    %c16_90 = arith.constant 16 : index
    %c0_91 = arith.constant 0 : index
    %281 = vector.load %arg6[%c16_90, %c0_91] : memref<32x128xf32, #tpu.memory_space<vmem>>, vector<1x128xf32>
    %282 = vector.broadcast %278 : vector<8x1xf32> to vector<8x128xf32>
    %283 = vector.broadcast %279 : vector<1x128xf32> to vector<8x128xf32>
    %284 = arith.subf %282, %283 : vector<8x128xf32>
    %285 = arith.mulf %284, %284 : vector<8x128xf32>
    %286 = vector.broadcast %281 : vector<1x128xf32> to vector<8x128xf32>
    %287 = arith.mulf %286, %285 : vector<8x128xf32>
    %288 = vector.broadcast %280 : vector<1x128xf32> to vector<8x128xf32>
    %289 = arith.subf %288, %287 : vector<8x128xf32>
    %290 = vector.broadcast %3 : vector<1x128xf32> to vector<8x128xf32>
    %291 = arith.mulf %290, %285 : vector<8x128xf32>
    %292 = math.exp2 %291 : vector<8x128xf32>
    %293 = arith.mulf %289, %292 : vector<8x128xf32>
    %294 = arith.addf %277, %293 : vector<8x128xf32>
    %295 = vector.extract_strided_slice %5 {offsets = [0, 17], sizes = [8, 1], strides = [1, 1]} : vector<8x32xf32> to vector<8x1xf32>
    %c17 = arith.constant 17 : index
    %c0_92 = arith.constant 0 : index
    %296 = vector.load %arg4[%c17, %c0_92] : memref<32x128xf32, #tpu.memory_space<vmem>>, vector<1x128xf32>
    %c17_93 = arith.constant 17 : index
    %c0_94 = arith.constant 0 : index
    %297 = vector.load %arg5[%c17_93, %c0_94] : memref<32x128xf32, #tpu.memory_space<vmem>>, vector<1x128xf32>
    %c17_95 = arith.constant 17 : index
    %c0_96 = arith.constant 0 : index
    %298 = vector.load %arg6[%c17_95, %c0_96] : memref<32x128xf32, #tpu.memory_space<vmem>>, vector<1x128xf32>
    %299 = vector.broadcast %295 : vector<8x1xf32> to vector<8x128xf32>
    %300 = vector.broadcast %296 : vector<1x128xf32> to vector<8x128xf32>
    %301 = arith.subf %299, %300 : vector<8x128xf32>
    %302 = arith.mulf %301, %301 : vector<8x128xf32>
    %303 = vector.broadcast %298 : vector<1x128xf32> to vector<8x128xf32>
    %304 = arith.mulf %303, %302 : vector<8x128xf32>
    %305 = vector.broadcast %297 : vector<1x128xf32> to vector<8x128xf32>
    %306 = arith.subf %305, %304 : vector<8x128xf32>
    %307 = vector.broadcast %3 : vector<1x128xf32> to vector<8x128xf32>
    %308 = arith.mulf %307, %302 : vector<8x128xf32>
    %309 = math.exp2 %308 : vector<8x128xf32>
    %310 = arith.mulf %306, %309 : vector<8x128xf32>
    %311 = arith.addf %294, %310 : vector<8x128xf32>
    %312 = vector.extract_strided_slice %5 {offsets = [0, 18], sizes = [8, 1], strides = [1, 1]} : vector<8x32xf32> to vector<8x1xf32>
    %c18 = arith.constant 18 : index
    %c0_97 = arith.constant 0 : index
    %313 = vector.load %arg4[%c18, %c0_97] : memref<32x128xf32, #tpu.memory_space<vmem>>, vector<1x128xf32>
    %c18_98 = arith.constant 18 : index
    %c0_99 = arith.constant 0 : index
    %314 = vector.load %arg5[%c18_98, %c0_99] : memref<32x128xf32, #tpu.memory_space<vmem>>, vector<1x128xf32>
    %c18_100 = arith.constant 18 : index
    %c0_101 = arith.constant 0 : index
    %315 = vector.load %arg6[%c18_100, %c0_101] : memref<32x128xf32, #tpu.memory_space<vmem>>, vector<1x128xf32>
    %316 = vector.broadcast %312 : vector<8x1xf32> to vector<8x128xf32>
    %317 = vector.broadcast %313 : vector<1x128xf32> to vector<8x128xf32>
    %318 = arith.subf %316, %317 : vector<8x128xf32>
    %319 = arith.mulf %318, %318 : vector<8x128xf32>
    %320 = vector.broadcast %315 : vector<1x128xf32> to vector<8x128xf32>
    %321 = arith.mulf %320, %319 : vector<8x128xf32>
    %322 = vector.broadcast %314 : vector<1x128xf32> to vector<8x128xf32>
    %323 = arith.subf %322, %321 : vector<8x128xf32>
    %324 = vector.broadcast %3 : vector<1x128xf32> to vector<8x128xf32>
    %325 = arith.mulf %324, %319 : vector<8x128xf32>
    %326 = math.exp2 %325 : vector<8x128xf32>
    %327 = arith.mulf %323, %326 : vector<8x128xf32>
    %328 = arith.addf %311, %327 : vector<8x128xf32>
    %329 = vector.extract_strided_slice %5 {offsets = [0, 19], sizes = [8, 1], strides = [1, 1]} : vector<8x32xf32> to vector<8x1xf32>
    %c19 = arith.constant 19 : index
    %c0_102 = arith.constant 0 : index
    %330 = vector.load %arg4[%c19, %c0_102] : memref<32x128xf32, #tpu.memory_space<vmem>>, vector<1x128xf32>
    %c19_103 = arith.constant 19 : index
    %c0_104 = arith.constant 0 : index
    %331 = vector.load %arg5[%c19_103, %c0_104] : memref<32x128xf32, #tpu.memory_space<vmem>>, vector<1x128xf32>
    %c19_105 = arith.constant 19 : index
    %c0_106 = arith.constant 0 : index
    %332 = vector.load %arg6[%c19_105, %c0_106] : memref<32x128xf32, #tpu.memory_space<vmem>>, vector<1x128xf32>
    %333 = vector.broadcast %329 : vector<8x1xf32> to vector<8x128xf32>
    %334 = vector.broadcast %330 : vector<1x128xf32> to vector<8x128xf32>
    %335 = arith.subf %333, %334 : vector<8x128xf32>
    %336 = arith.mulf %335, %335 : vector<8x128xf32>
    %337 = vector.broadcast %332 : vector<1x128xf32> to vector<8x128xf32>
    %338 = arith.mulf %337, %336 : vector<8x128xf32>
    %339 = vector.broadcast %331 : vector<1x128xf32> to vector<8x128xf32>
    %340 = arith.subf %339, %338 : vector<8x128xf32>
    %341 = vector.broadcast %3 : vector<1x128xf32> to vector<8x128xf32>
    %342 = arith.mulf %341, %336 : vector<8x128xf32>
    %343 = math.exp2 %342 : vector<8x128xf32>
    %344 = arith.mulf %340, %343 : vector<8x128xf32>
    %345 = arith.addf %328, %344 : vector<8x128xf32>
    %346 = vector.extract_strided_slice %5 {offsets = [0, 20], sizes = [8, 1], strides = [1, 1]} : vector<8x32xf32> to vector<8x1xf32>
    %c20 = arith.constant 20 : index
    %c0_107 = arith.constant 0 : index
    %347 = vector.load %arg4[%c20, %c0_107] : memref<32x128xf32, #tpu.memory_space<vmem>>, vector<1x128xf32>
    %c20_108 = arith.constant 20 : index
    %c0_109 = arith.constant 0 : index
    %348 = vector.load %arg5[%c20_108, %c0_109] : memref<32x128xf32, #tpu.memory_space<vmem>>, vector<1x128xf32>
    %c20_110 = arith.constant 20 : index
    %c0_111 = arith.constant 0 : index
    %349 = vector.load %arg6[%c20_110, %c0_111] : memref<32x128xf32, #tpu.memory_space<vmem>>, vector<1x128xf32>
    %350 = vector.broadcast %346 : vector<8x1xf32> to vector<8x128xf32>
    %351 = vector.broadcast %347 : vector<1x128xf32> to vector<8x128xf32>
    %352 = arith.subf %350, %351 : vector<8x128xf32>
    %353 = arith.mulf %352, %352 : vector<8x128xf32>
    %354 = vector.broadcast %349 : vector<1x128xf32> to vector<8x128xf32>
    %355 = arith.mulf %354, %353 : vector<8x128xf32>
    %356 = vector.broadcast %348 : vector<1x128xf32> to vector<8x128xf32>
    %357 = arith.subf %356, %355 : vector<8x128xf32>
    %358 = vector.broadcast %3 : vector<1x128xf32> to vector<8x128xf32>
    %359 = arith.mulf %358, %353 : vector<8x128xf32>
    %360 = math.exp2 %359 : vector<8x128xf32>
    %361 = arith.mulf %357, %360 : vector<8x128xf32>
    %362 = arith.addf %345, %361 : vector<8x128xf32>
    %363 = vector.extract_strided_slice %5 {offsets = [0, 21], sizes = [8, 1], strides = [1, 1]} : vector<8x32xf32> to vector<8x1xf32>
    %c21 = arith.constant 21 : index
    %c0_112 = arith.constant 0 : index
    %364 = vector.load %arg4[%c21, %c0_112] : memref<32x128xf32, #tpu.memory_space<vmem>>, vector<1x128xf32>
    %c21_113 = arith.constant 21 : index
    %c0_114 = arith.constant 0 : index
    %365 = vector.load %arg5[%c21_113, %c0_114] : memref<32x128xf32, #tpu.memory_space<vmem>>, vector<1x128xf32>
    %c21_115 = arith.constant 21 : index
    %c0_116 = arith.constant 0 : index
    %366 = vector.load %arg6[%c21_115, %c0_116] : memref<32x128xf32, #tpu.memory_space<vmem>>, vector<1x128xf32>
    %367 = vector.broadcast %363 : vector<8x1xf32> to vector<8x128xf32>
    %368 = vector.broadcast %364 : vector<1x128xf32> to vector<8x128xf32>
    %369 = arith.subf %367, %368 : vector<8x128xf32>
    %370 = arith.mulf %369, %369 : vector<8x128xf32>
    %371 = vector.broadcast %366 : vector<1x128xf32> to vector<8x128xf32>
    %372 = arith.mulf %371, %370 : vector<8x128xf32>
    %373 = vector.broadcast %365 : vector<1x128xf32> to vector<8x128xf32>
    %374 = arith.subf %373, %372 : vector<8x128xf32>
    %375 = vector.broadcast %3 : vector<1x128xf32> to vector<8x128xf32>
    %376 = arith.mulf %375, %370 : vector<8x128xf32>
    %377 = math.exp2 %376 : vector<8x128xf32>
    %378 = arith.mulf %374, %377 : vector<8x128xf32>
    %379 = arith.addf %362, %378 : vector<8x128xf32>
    %380 = vector.extract_strided_slice %5 {offsets = [0, 22], sizes = [8, 1], strides = [1, 1]} : vector<8x32xf32> to vector<8x1xf32>
    %c22 = arith.constant 22 : index
    %c0_117 = arith.constant 0 : index
    %381 = vector.load %arg4[%c22, %c0_117] : memref<32x128xf32, #tpu.memory_space<vmem>>, vector<1x128xf32>
    %c22_118 = arith.constant 22 : index
    %c0_119 = arith.constant 0 : index
    %382 = vector.load %arg5[%c22_118, %c0_119] : memref<32x128xf32, #tpu.memory_space<vmem>>, vector<1x128xf32>
    %c22_120 = arith.constant 22 : index
    %c0_121 = arith.constant 0 : index
    %383 = vector.load %arg6[%c22_120, %c0_121] : memref<32x128xf32, #tpu.memory_space<vmem>>, vector<1x128xf32>
    %384 = vector.broadcast %380 : vector<8x1xf32> to vector<8x128xf32>
    %385 = vector.broadcast %381 : vector<1x128xf32> to vector<8x128xf32>
    %386 = arith.subf %384, %385 : vector<8x128xf32>
    %387 = arith.mulf %386, %386 : vector<8x128xf32>
    %388 = vector.broadcast %383 : vector<1x128xf32> to vector<8x128xf32>
    %389 = arith.mulf %388, %387 : vector<8x128xf32>
    %390 = vector.broadcast %382 : vector<1x128xf32> to vector<8x128xf32>
    %391 = arith.subf %390, %389 : vector<8x128xf32>
    %392 = vector.broadcast %3 : vector<1x128xf32> to vector<8x128xf32>
    %393 = arith.mulf %392, %387 : vector<8x128xf32>
    %394 = math.exp2 %393 : vector<8x128xf32>
    %395 = arith.mulf %391, %394 : vector<8x128xf32>
    %396 = arith.addf %379, %395 : vector<8x128xf32>
    %397 = vector.extract_strided_slice %5 {offsets = [0, 23], sizes = [8, 1], strides = [1, 1]} : vector<8x32xf32> to vector<8x1xf32>
    %c23 = arith.constant 23 : index
    %c0_122 = arith.constant 0 : index
    %398 = vector.load %arg4[%c23, %c0_122] : memref<32x128xf32, #tpu.memory_space<vmem>>, vector<1x128xf32>
    %c23_123 = arith.constant 23 : index
    %c0_124 = arith.constant 0 : index
    %399 = vector.load %arg5[%c23_123, %c0_124] : memref<32x128xf32, #tpu.memory_space<vmem>>, vector<1x128xf32>
    %c23_125 = arith.constant 23 : index
    %c0_126 = arith.constant 0 : index
    %400 = vector.load %arg6[%c23_125, %c0_126] : memref<32x128xf32, #tpu.memory_space<vmem>>, vector<1x128xf32>
    %401 = vector.broadcast %397 : vector<8x1xf32> to vector<8x128xf32>
    %402 = vector.broadcast %398 : vector<1x128xf32> to vector<8x128xf32>
    %403 = arith.subf %401, %402 : vector<8x128xf32>
    %404 = arith.mulf %403, %403 : vector<8x128xf32>
    %405 = vector.broadcast %400 : vector<1x128xf32> to vector<8x128xf32>
    %406 = arith.mulf %405, %404 : vector<8x128xf32>
    %407 = vector.broadcast %399 : vector<1x128xf32> to vector<8x128xf32>
    %408 = arith.subf %407, %406 : vector<8x128xf32>
    %409 = vector.broadcast %3 : vector<1x128xf32> to vector<8x128xf32>
    %410 = arith.mulf %409, %404 : vector<8x128xf32>
    %411 = math.exp2 %410 : vector<8x128xf32>
    %412 = arith.mulf %408, %411 : vector<8x128xf32>
    %413 = arith.addf %396, %412 : vector<8x128xf32>
    %414 = vector.extract_strided_slice %5 {offsets = [0, 24], sizes = [8, 1], strides = [1, 1]} : vector<8x32xf32> to vector<8x1xf32>
    %c24 = arith.constant 24 : index
    %c0_127 = arith.constant 0 : index
    %415 = vector.load %arg4[%c24, %c0_127] : memref<32x128xf32, #tpu.memory_space<vmem>>, vector<1x128xf32>
    %c24_128 = arith.constant 24 : index
    %c0_129 = arith.constant 0 : index
    %416 = vector.load %arg5[%c24_128, %c0_129] : memref<32x128xf32, #tpu.memory_space<vmem>>, vector<1x128xf32>
    %c24_130 = arith.constant 24 : index
    %c0_131 = arith.constant 0 : index
    %417 = vector.load %arg6[%c24_130, %c0_131] : memref<32x128xf32, #tpu.memory_space<vmem>>, vector<1x128xf32>
    %418 = vector.broadcast %414 : vector<8x1xf32> to vector<8x128xf32>
    %419 = vector.broadcast %415 : vector<1x128xf32> to vector<8x128xf32>
    %420 = arith.subf %418, %419 : vector<8x128xf32>
    %421 = arith.mulf %420, %420 : vector<8x128xf32>
    %422 = vector.broadcast %417 : vector<1x128xf32> to vector<8x128xf32>
    %423 = arith.mulf %422, %421 : vector<8x128xf32>
    %424 = vector.broadcast %416 : vector<1x128xf32> to vector<8x128xf32>
    %425 = arith.subf %424, %423 : vector<8x128xf32>
    %426 = vector.broadcast %3 : vector<1x128xf32> to vector<8x128xf32>
    %427 = arith.mulf %426, %421 : vector<8x128xf32>
    %428 = math.exp2 %427 : vector<8x128xf32>
    %429 = arith.mulf %425, %428 : vector<8x128xf32>
    %430 = arith.addf %413, %429 : vector<8x128xf32>
    %431 = vector.extract_strided_slice %5 {offsets = [0, 25], sizes = [8, 1], strides = [1, 1]} : vector<8x32xf32> to vector<8x1xf32>
    %c25 = arith.constant 25 : index
    %c0_132 = arith.constant 0 : index
    %432 = vector.load %arg4[%c25, %c0_132] : memref<32x128xf32, #tpu.memory_space<vmem>>, vector<1x128xf32>
    %c25_133 = arith.constant 25 : index
    %c0_134 = arith.constant 0 : index
    %433 = vector.load %arg5[%c25_133, %c0_134] : memref<32x128xf32, #tpu.memory_space<vmem>>, vector<1x128xf32>
    %c25_135 = arith.constant 25 : index
    %c0_136 = arith.constant 0 : index
    %434 = vector.load %arg6[%c25_135, %c0_136] : memref<32x128xf32, #tpu.memory_space<vmem>>, vector<1x128xf32>
    %435 = vector.broadcast %431 : vector<8x1xf32> to vector<8x128xf32>
    %436 = vector.broadcast %432 : vector<1x128xf32> to vector<8x128xf32>
    %437 = arith.subf %435, %436 : vector<8x128xf32>
    %438 = arith.mulf %437, %437 : vector<8x128xf32>
    %439 = vector.broadcast %434 : vector<1x128xf32> to vector<8x128xf32>
    %440 = arith.mulf %439, %438 : vector<8x128xf32>
    %441 = vector.broadcast %433 : vector<1x128xf32> to vector<8x128xf32>
    %442 = arith.subf %441, %440 : vector<8x128xf32>
    %443 = vector.broadcast %3 : vector<1x128xf32> to vector<8x128xf32>
    %444 = arith.mulf %443, %438 : vector<8x128xf32>
    %445 = math.exp2 %444 : vector<8x128xf32>
    %446 = arith.mulf %442, %445 : vector<8x128xf32>
    %447 = arith.addf %430, %446 : vector<8x128xf32>
    %448 = vector.extract_strided_slice %5 {offsets = [0, 26], sizes = [8, 1], strides = [1, 1]} : vector<8x32xf32> to vector<8x1xf32>
    %c26 = arith.constant 26 : index
    %c0_137 = arith.constant 0 : index
    %449 = vector.load %arg4[%c26, %c0_137] : memref<32x128xf32, #tpu.memory_space<vmem>>, vector<1x128xf32>
    %c26_138 = arith.constant 26 : index
    %c0_139 = arith.constant 0 : index
    %450 = vector.load %arg5[%c26_138, %c0_139] : memref<32x128xf32, #tpu.memory_space<vmem>>, vector<1x128xf32>
    %c26_140 = arith.constant 26 : index
    %c0_141 = arith.constant 0 : index
    %451 = vector.load %arg6[%c26_140, %c0_141] : memref<32x128xf32, #tpu.memory_space<vmem>>, vector<1x128xf32>
    %452 = vector.broadcast %448 : vector<8x1xf32> to vector<8x128xf32>
    %453 = vector.broadcast %449 : vector<1x128xf32> to vector<8x128xf32>
    %454 = arith.subf %452, %453 : vector<8x128xf32>
    %455 = arith.mulf %454, %454 : vector<8x128xf32>
    %456 = vector.broadcast %451 : vector<1x128xf32> to vector<8x128xf32>
    %457 = arith.mulf %456, %455 : vector<8x128xf32>
    %458 = vector.broadcast %450 : vector<1x128xf32> to vector<8x128xf32>
    %459 = arith.subf %458, %457 : vector<8x128xf32>
    %460 = vector.broadcast %3 : vector<1x128xf32> to vector<8x128xf32>
    %461 = arith.mulf %460, %455 : vector<8x128xf32>
    %462 = math.exp2 %461 : vector<8x128xf32>
    %463 = arith.mulf %459, %462 : vector<8x128xf32>
    %464 = arith.addf %447, %463 : vector<8x128xf32>
    %465 = vector.extract_strided_slice %5 {offsets = [0, 27], sizes = [8, 1], strides = [1, 1]} : vector<8x32xf32> to vector<8x1xf32>
    %c27 = arith.constant 27 : index
    %c0_142 = arith.constant 0 : index
    %466 = vector.load %arg4[%c27, %c0_142] : memref<32x128xf32, #tpu.memory_space<vmem>>, vector<1x128xf32>
    %c27_143 = arith.constant 27 : index
    %c0_144 = arith.constant 0 : index
    %467 = vector.load %arg5[%c27_143, %c0_144] : memref<32x128xf32, #tpu.memory_space<vmem>>, vector<1x128xf32>
    %c27_145 = arith.constant 27 : index
    %c0_146 = arith.constant 0 : index
    %468 = vector.load %arg6[%c27_145, %c0_146] : memref<32x128xf32, #tpu.memory_space<vmem>>, vector<1x128xf32>
    %469 = vector.broadcast %465 : vector<8x1xf32> to vector<8x128xf32>
    %470 = vector.broadcast %466 : vector<1x128xf32> to vector<8x128xf32>
    %471 = arith.subf %469, %470 : vector<8x128xf32>
    %472 = arith.mulf %471, %471 : vector<8x128xf32>
    %473 = vector.broadcast %468 : vector<1x128xf32> to vector<8x128xf32>
    %474 = arith.mulf %473, %472 : vector<8x128xf32>
    %475 = vector.broadcast %467 : vector<1x128xf32> to vector<8x128xf32>
    %476 = arith.subf %475, %474 : vector<8x128xf32>
    %477 = vector.broadcast %3 : vector<1x128xf32> to vector<8x128xf32>
    %478 = arith.mulf %477, %472 : vector<8x128xf32>
    %479 = math.exp2 %478 : vector<8x128xf32>
    %480 = arith.mulf %476, %479 : vector<8x128xf32>
    %481 = arith.addf %464, %480 : vector<8x128xf32>
    %482 = vector.extract_strided_slice %5 {offsets = [0, 28], sizes = [8, 1], strides = [1, 1]} : vector<8x32xf32> to vector<8x1xf32>
    %c28 = arith.constant 28 : index
    %c0_147 = arith.constant 0 : index
    %483 = vector.load %arg4[%c28, %c0_147] : memref<32x128xf32, #tpu.memory_space<vmem>>, vector<1x128xf32>
    %c28_148 = arith.constant 28 : index
    %c0_149 = arith.constant 0 : index
    %484 = vector.load %arg5[%c28_148, %c0_149] : memref<32x128xf32, #tpu.memory_space<vmem>>, vector<1x128xf32>
    %c28_150 = arith.constant 28 : index
    %c0_151 = arith.constant 0 : index
    %485 = vector.load %arg6[%c28_150, %c0_151] : memref<32x128xf32, #tpu.memory_space<vmem>>, vector<1x128xf32>
    %486 = vector.broadcast %482 : vector<8x1xf32> to vector<8x128xf32>
    %487 = vector.broadcast %483 : vector<1x128xf32> to vector<8x128xf32>
    %488 = arith.subf %486, %487 : vector<8x128xf32>
    %489 = arith.mulf %488, %488 : vector<8x128xf32>
    %490 = vector.broadcast %485 : vector<1x128xf32> to vector<8x128xf32>
    %491 = arith.mulf %490, %489 : vector<8x128xf32>
    %492 = vector.broadcast %484 : vector<1x128xf32> to vector<8x128xf32>
    %493 = arith.subf %492, %491 : vector<8x128xf32>
    %494 = vector.broadcast %3 : vector<1x128xf32> to vector<8x128xf32>
    %495 = arith.mulf %494, %489 : vector<8x128xf32>
    %496 = math.exp2 %495 : vector<8x128xf32>
    %497 = arith.mulf %493, %496 : vector<8x128xf32>
    %498 = arith.addf %481, %497 : vector<8x128xf32>
    %499 = vector.extract_strided_slice %5 {offsets = [0, 29], sizes = [8, 1], strides = [1, 1]} : vector<8x32xf32> to vector<8x1xf32>
    %c29 = arith.constant 29 : index
    %c0_152 = arith.constant 0 : index
    %500 = vector.load %arg4[%c29, %c0_152] : memref<32x128xf32, #tpu.memory_space<vmem>>, vector<1x128xf32>
    %c29_153 = arith.constant 29 : index
    %c0_154 = arith.constant 0 : index
    %501 = vector.load %arg5[%c29_153, %c0_154] : memref<32x128xf32, #tpu.memory_space<vmem>>, vector<1x128xf32>
    %c29_155 = arith.constant 29 : index
    %c0_156 = arith.constant 0 : index
    %502 = vector.load %arg6[%c29_155, %c0_156] : memref<32x128xf32, #tpu.memory_space<vmem>>, vector<1x128xf32>
    %503 = vector.broadcast %499 : vector<8x1xf32> to vector<8x128xf32>
    %504 = vector.broadcast %500 : vector<1x128xf32> to vector<8x128xf32>
    %505 = arith.subf %503, %504 : vector<8x128xf32>
    %506 = arith.mulf %505, %505 : vector<8x128xf32>
    %507 = vector.broadcast %502 : vector<1x128xf32> to vector<8x128xf32>
    %508 = arith.mulf %507, %506 : vector<8x128xf32>
    %509 = vector.broadcast %501 : vector<1x128xf32> to vector<8x128xf32>
    %510 = arith.subf %509, %508 : vector<8x128xf32>
    %511 = vector.broadcast %3 : vector<1x128xf32> to vector<8x128xf32>
    %512 = arith.mulf %511, %506 : vector<8x128xf32>
    %513 = math.exp2 %512 : vector<8x128xf32>
    %514 = arith.mulf %510, %513 : vector<8x128xf32>
    %515 = arith.addf %498, %514 : vector<8x128xf32>
    %516 = vector.extract_strided_slice %5 {offsets = [0, 30], sizes = [8, 1], strides = [1, 1]} : vector<8x32xf32> to vector<8x1xf32>
    %c30 = arith.constant 30 : index
    %c0_157 = arith.constant 0 : index
    %517 = vector.load %arg4[%c30, %c0_157] : memref<32x128xf32, #tpu.memory_space<vmem>>, vector<1x128xf32>
    %c30_158 = arith.constant 30 : index
    %c0_159 = arith.constant 0 : index
    %518 = vector.load %arg5[%c30_158, %c0_159] : memref<32x128xf32, #tpu.memory_space<vmem>>, vector<1x128xf32>
    %c30_160 = arith.constant 30 : index
    %c0_161 = arith.constant 0 : index
    %519 = vector.load %arg6[%c30_160, %c0_161] : memref<32x128xf32, #tpu.memory_space<vmem>>, vector<1x128xf32>
    %520 = vector.broadcast %516 : vector<8x1xf32> to vector<8x128xf32>
    %521 = vector.broadcast %517 : vector<1x128xf32> to vector<8x128xf32>
    %522 = arith.subf %520, %521 : vector<8x128xf32>
    %523 = arith.mulf %522, %522 : vector<8x128xf32>
    %524 = vector.broadcast %519 : vector<1x128xf32> to vector<8x128xf32>
    %525 = arith.mulf %524, %523 : vector<8x128xf32>
    %526 = vector.broadcast %518 : vector<1x128xf32> to vector<8x128xf32>
    %527 = arith.subf %526, %525 : vector<8x128xf32>
    %528 = vector.broadcast %3 : vector<1x128xf32> to vector<8x128xf32>
    %529 = arith.mulf %528, %523 : vector<8x128xf32>
    %530 = math.exp2 %529 : vector<8x128xf32>
    %531 = arith.mulf %527, %530 : vector<8x128xf32>
    %532 = arith.addf %515, %531 : vector<8x128xf32>
    %533 = vector.extract_strided_slice %5 {offsets = [0, 31], sizes = [8, 1], strides = [1, 1]} : vector<8x32xf32> to vector<8x1xf32>
    %c31 = arith.constant 31 : index
    %c0_162 = arith.constant 0 : index
    %534 = vector.load %arg4[%c31, %c0_162] : memref<32x128xf32, #tpu.memory_space<vmem>>, vector<1x128xf32>
    %c31_163 = arith.constant 31 : index
    %c0_164 = arith.constant 0 : index
    %535 = vector.load %arg5[%c31_163, %c0_164] : memref<32x128xf32, #tpu.memory_space<vmem>>, vector<1x128xf32>
    %c31_165 = arith.constant 31 : index
    %c0_166 = arith.constant 0 : index
    %536 = vector.load %arg6[%c31_165, %c0_166] : memref<32x128xf32, #tpu.memory_space<vmem>>, vector<1x128xf32>
    %537 = vector.broadcast %533 : vector<8x1xf32> to vector<8x128xf32>
    %538 = vector.broadcast %534 : vector<1x128xf32> to vector<8x128xf32>
    %539 = arith.subf %537, %538 : vector<8x128xf32>
    %540 = arith.mulf %539, %539 : vector<8x128xf32>
    %541 = vector.broadcast %536 : vector<1x128xf32> to vector<8x128xf32>
    %542 = arith.mulf %541, %540 : vector<8x128xf32>
    %543 = vector.broadcast %535 : vector<1x128xf32> to vector<8x128xf32>
    %544 = arith.subf %543, %542 : vector<8x128xf32>
    %545 = vector.broadcast %3 : vector<1x128xf32> to vector<8x128xf32>
    %546 = arith.mulf %545, %540 : vector<8x128xf32>
    %547 = math.exp2 %546 : vector<8x128xf32>
    %548 = arith.mulf %544, %547 : vector<8x128xf32>
    %549 = arith.addf %532, %548 : vector<8x128xf32>
    %c0_167 = arith.constant 0 : index
    %c0_168 = arith.constant 0 : index
    %550 = vector.load %arg8[%c0_167, %c0_168] : memref<8x128xf32, #tpu.memory_space<vmem>>, vector<8x128xf32>
    tpu.vector_store %arg8[%c0_167, %c0_168], %549 {strides = array<i32>} : memref<8x128xf32, #tpu.memory_space<vmem>>, vector<8x128xf32>,
    return
  }
  func.func @transform_0(%arg0: i32, %arg1: i32, %arg2: i32) -> (i32, i32) {
    %c0_i32 = arith.constant 0 : i32
    return %arg0, %arg2 : i32, i32
  }
  func.func @transform_1(%arg0: i32, %arg1: i32, %arg2: i32) -> (i32, i32) {
    %c0_i32 = arith.constant 0 : i32
    return %arg2, %arg1 : i32, i32
  }
  func.func @transform_2(%arg0: i32, %arg1: i32, %arg2: i32) -> (i32, i32) {
    %c0_i32 = arith.constant 0 : i32
    return %arg2, %arg1 : i32, i32
  }
  func.func @transform_3(%arg0: i32, %arg1: i32, %arg2: i32) -> (i32, i32) {
    %c0_i32 = arith.constant 0 : i32
    return %arg2, %arg1 : i32, i32
  }
  func.func @transform_4(%arg0: i32, %arg1: i32, %arg2: i32) -> (i32, i32) {
    %c0_i32 = arith.constant 0 : i32
    %c0_i32_0 = arith.constant 0 : i32
    return %c0_i32, %arg1 : i32, i32
  }
  func.func @transform_5(%arg0: i32, %arg1: i32, %arg2: i32) -> (i32, i32) {
    %c0_i32 = arith.constant 0 : i32
    return %arg0, %arg1 : i32, i32
  }
}

</mosaic_0001>

<llo_original>
// kernel: tpu_custom_call.1
$region0: #{tpu_custom_call.1}
  #allocation0 [shape = 'u32[]', space=smem, size = 0x4, offset = 0x4, fixed_abs, tag = 'smem constant byte address 0x4 - core index']
  #allocation1 [shape = 'u32[144,128]{1,0:T(1,128)}', space=vmem, size = 0x12000, scoped, tag = 'internal scratch']
  %s0 = inlined_call_operand.hbm [shape: f32[8,32], index: 0, kind: input, shape index: {}]
  %s1 = inlined_call_operand.hbm [shape: f32[32,128], index: 1, kind: input, shape index: {}]
  %s2 = inlined_call_operand.hbm [shape: f32[32,128], index: 2, kind: input, shape index: {}]
  %s3 = inlined_call_operand.hbm [shape: f32[32,128], index: 3, kind: input, shape index: {}]
  %s4 = inlined_call_operand.vmem [shape: f32[1,128], index: 4, kind: input, shape index: {}]
  %s5 = inlined_call_operand.hbm [shape: f32[8,128], index: 5, kind: output, shape index: {}]
  %s6 = sld [smem:[#allocation0]]
  $region50: #{tpu_custom_call.1} parent=0
    _
  %s8 = ssub.s32 1, %s6
  %s9 = scalar_select 0, %s8, %s6
  $region1: #{tpu_custom_call.1} parent=0
    #allocation2 [shape = 'u8[4096]{0}', space=vmem, size = 0x1000, scoped, tag = 'input window, operand 0, single buffered']
    #allocation3 [shape = 's32[1]{0}', space=sflag, size = 0x4, scoped, tag = 'scoped memory for tpu_custom_call.1']
    #allocation4 [shape = 's32[1]{0}', space=sflag, size = 0x4, scoped, tag = 'scoped memory for tpu_custom_call.1']
    #allocation5 [shape = 'u8[16384]{0}', space=vmem, size = 0x4000, scoped, tag = 'input window, operand 1, single buffered']
    #allocation6 [shape = 's32[1]{0}', space=sflag, size = 0x4, scoped, tag = 'scoped memory for tpu_custom_call.1']
    #allocation7 [shape = 'u8[16384]{0}', space=vmem, size = 0x4000, scoped, tag = 'input window, operand 2, single buffered']
    #allocation8 [shape = 'u8[16384]{0}', space=vmem, size = 0x4000, scoped, tag = 'input window, operand 3, single buffered']
    #allocation9 [shape = 's32[1]{0}', space=sflag, size = 0x4, scoped, tag = 'scoped memory for tpu_custom_call.1']
    #allocation10 [shape = 'u8[4096]{0}', space=vmem, size = 0x1000, scoped, tag = 'output window, operand 0, single buffered']
    %10 = vsyncpa [#allocation3], 0
    %11 = vsyncpa [#allocation6], 0
    %12 = vsyncpa [#allocation9], 0
    %13 = vsyncpa [#allocation4], 0
    // Predicated region
    $region2: #{tpu_custom_call.1} parent=1 // pred_check
      _
    $region3: #{tpu_custom_call.1} parent=1 // pred_check_branch
      %15 = sbr.rel (0) target = $region5
    $region4: #{tpu_custom_call.1} parent=1 // pred_region
      %s17 = ssub.s32 128, 128
      %18 = vsyncadd [#allocation3], %s17
      %s20 = sshll.u32 [#allocation2], 4
      %s21 = int_to_ptr.vmem [resolvable:$true] %s20
      %23 = dma.hbm_to_vmem [thread:$0]  %s0, 128, %s21, [#allocation3]
    $region5: #{tpu_custom_call.1} parent=1 // pred_fallthru
      _
    // Predicated region
    $region6: #{tpu_custom_call.1} parent=1 // pred_check
      _
    $region7: #{tpu_custom_call.1} parent=1 // pred_check_branch
      %25 = sbr.rel (0) target = $region9
    $region8: #{tpu_custom_call.1} parent=1 // pred_region
      %s27 = ssub.s32 512, 512
      %28 = vsyncadd [#allocation6], %s27
      %s29 = sshll.u32 [#allocation5], 4
      %s30 = int_to_ptr.vmem [resolvable:$true] %s29
      %35 = dma.hbm_to_vmem [thread:$0]  %s1, 512, %s30, [#allocation6], 128, 128, 8
    $region9: #{tpu_custom_call.1} parent=1 // pred_fallthru
      _
    // Predicated region
    $region10: #{tpu_custom_call.1} parent=1 // pred_check
      _
    $region11: #{tpu_custom_call.1} parent=1 // pred_check_branch
      %37 = sbr.rel (0) target = $region13
    $region12: #{tpu_custom_call.1} parent=1 // pred_region
      %s39 = ssub.s32 512, 512
      %40 = vsyncadd [#allocation6], %s39
      %s41 = sshll.u32 [#allocation7], 4
      %s42 = int_to_ptr.vmem [resolvable:$true] %s41
      %47 = dma.hbm_to_vmem [thread:$0]  %s2, 512, %s42, [#allocation6], 128, 128, 8
    $region13: #{tpu_custom_call.1} parent=1 // pred_fallthru
      _
    // Predicated region
    $region14: #{tpu_custom_call.1} parent=1 // pred_check
      _
    $region15: #{tpu_custom_call.1} parent=1 // pred_check_branch
      %49 = sbr.rel (0) target = $region17
    $region16: #{tpu_custom_call.1} parent=1 // pred_region
      %s51 = ssub.s32 512, 512
      %52 = vsyncadd [#allocation9], %s51
      %s53 = sshll.u32 [#allocation8], 4
      %s54 = int_to_ptr.vmem [resolvable:$true] %s53
      %59 = dma.hbm_to_vmem [thread:$0]  %s3, 512, %s54, [#allocation9], 128, 128, 8
    $region17: #{tpu_custom_call.1} parent=1 // pred_fallthru
      _
    // Predicated region
    $region18: #{tpu_custom_call.1} parent=1 // pred_check
      _
    $region19: #{tpu_custom_call.1} parent=1 // pred_check_branch
      %61 = sbr.rel (0) target = $region21
    $region20: #{tpu_custom_call.1} parent=1 // pred_region
      _
    $region21: #{tpu_custom_call.1} parent=1 // pred_fallthru
      _
    // Predicated region
    $region22: #{tpu_custom_call.1} parent=1 // pred_check
      _
    $region23: #{tpu_custom_call.1} parent=1 // pred_check_branch
      %63 = sbr.rel (0) target = $region25
    $region24: #{tpu_custom_call.1} parent=1 // pred_region
      %64 = dma.done [#allocation3], 128
    $region25: #{tpu_custom_call.1} parent=1 // pred_fallthru
      _
    // Predicated region
    $region26: #{tpu_custom_call.1} parent=1 // pred_check
      _
    $region27: #{tpu_custom_call.1} parent=1 // pred_check_branch
      %66 = sbr.rel (0) target = $region29
    $region28: #{tpu_custom_call.1} parent=1 // pred_region
      %67 = dma.done [#allocation6], 512
    $region29: #{tpu_custom_call.1} parent=1 // pred_fallthru
      _
    // Predicated region
    $region30: #{tpu_custom_call.1} parent=1 // pred_check
      _
    $region31: #{tpu_custom_call.1} parent=1 // pred_check_branch
      %69 = sbr.rel (0) target = $region33
    $region32: #{tpu_custom_call.1} parent=1 // pred_region
      %70 = dma.done [#allocation6], 512
    $region33: #{tpu_custom_call.1} parent=1 // pred_fallthru
      _
    // Predicated region
    $region34: #{tpu_custom_call.1} parent=1 // pred_check
      _
    $region35: #{tpu_custom_call.1} parent=1 // pred_check_branch
      %72 = sbr.rel (0) target = $region37
    $region36: #{tpu_custom_call.1} parent=1 // pred_region
      %73 = dma.done [#allocation9], 512
    $region37: #{tpu_custom_call.1} parent=1 // pred_fallthru
      _
    %p74 = scmp.eq.s32.totalorder 0, 0
    // Predicated region
    $region38: #{tpu_custom_call.1} parent=1 // pred_check
      %p75 = pneg %p74
    $region39: #{tpu_custom_call.1} parent=1 // pred_check_branch
      %77 = sbr.rel (%p75) target = $region41
    $region40: #{tpu_custom_call.1} parent=1 // pred_region
      %78 = vst [vmem:[#allocation10] sm:$0xff] 0.0
    $region41: #{tpu_custom_call.1} parent=1 // pred_fallthru
      _
    %v79 = vld [vmem:[%s4] sm:$0x1]
    %v80 = vld [vmem:[#allocation10] sm:$0xff]
    %v81 = vld [vmem:[#allocation2] sm:$0xff]
    %v82 = vld [vmem:[#allocation5] sm:$0x1]
    %v83 = vld [vmem:[#allocation7] sm:$0x1]
    %v84 = vld [vmem:[#allocation8] sm:$0x1]
    %86 = vset.pattern.permute.xlu0 0
    %87 = vperm.xlu0 %86, %v81
    %v88 = vpop.permute.xlu0 %87
    %v90 = vlaneseq
    %v91 = vshrl.u32 %v90, 7
    %v92 = vsub.s32 0, %v91
    %v93 = vrot.slane %v82, %v92
    %v94 = vsub.f32 %v88, %v93
    %v95 = vmul.f32 %v94, %v94
    %v96 = vlaneseq
    %v97 = vshrl.u32 %v96, 7
    %v98 = vsub.s32 0, %v97
    %v99 = vrot.slane %v84, %v98
    %v100 = vmul.f32 %v99, %v95
    %v101 = vlaneseq
    %v102 = vshrl.u32 %v101, 7
    %v103 = vsub.s32 0, %v102
    %v104 = vrot.slane %v83, %v103
    %v105 = vsub.f32 %v104, %v100
    %v107 = vlaneseq
    %v108 = vshrl.u32 %v107, 7
    %v109 = vsub.s32 0, %v108
    %v110 = vrot.slane %v79, %v109
    %v112 = vmul.f32 %v110, %v95
    %v113 = vpow.pop %v112
    %v114 = vmul.f32 %v105, %v113
    %v115 = vadd.f32 %v80, %v114
    %v116 = vld [vmem:[#allocation5 + $0x1] sm:$0x1]
    %v117 = vld [vmem:[#allocation7 + $0x1] sm:$0x1]
    %v118 = vld [vmem:[#allocation8 + $0x1] sm:$0x1]
    %119 = vset.pattern.permute.xlu0 1
    %120 = vperm.xlu0 %119, %v81
    %v121 = vpop.permute.xlu0 %120
    %v123 = vlaneseq
    %v124 = vshrl.u32 %v123, 7
    %v125 = vsub.s32 0, %v124
    %v126 = vrot.slane %v116, %v125
    %v127 = vsub.f32 %v121, %v126
    %v128 = vmul.f32 %v127, %v127
    %v129 = vlaneseq
    %v130 = vshrl.u32 %v129, 7
    %v131 = vsub.s32 0, %v130
    %v132 = vrot.slane %v118, %v131
    %v133 = vmul.f32 %v132, %v128
    %v134 = vlaneseq
    %v135 = vshrl.u32 %v134, 7
    %v136 = vsub.s32 0, %v135
    %v137 = vrot.slane %v117, %v136
    %v138 = vsub.f32 %v137, %v133
    %v139 = vmul.f32 %v110, %v128
    %v140 = vpow.pop %v139
    %v141 = vmul.f32 %v138, %v140
    %v142 = vadd.f32 %v115, %v141
    %v143 = vld [vmem:[#allocation5 + $0x2] sm:$0x1]
    %v144 = vld [vmem:[#allocation7 + $0x2] sm:$0x1]
    %v145 = vld [vmem:[#allocation8 + $0x2] sm:$0x1]
    %146 = vset.pattern.permute.xlu0 2
    %147 = vperm.xlu0 %146, %v81
    %v148 = vpop.permute.xlu0 %147
    %v150 = vlaneseq
    %v151 = vshrl.u32 %v150, 7
    %v152 = vsub.s32 0, %v151
    %v153 = vrot.slane %v143, %v152
    %v154 = vsub.f32 %v148, %v153
    %v155 = vmul.f32 %v154, %v154
    %v156 = vlaneseq
    %v157 = vshrl.u32 %v156, 7
    %v158 = vsub.s32 0, %v157
    %v159 = vrot.slane %v145, %v158
    %v160 = vmul.f32 %v159, %v155
    %v161 = vlaneseq
    %v162 = vshrl.u32 %v161, 7
    %v163 = vsub.s32 0, %v162
    %v164 = vrot.slane %v144, %v163
    %v165 = vsub.f32 %v164, %v160
    %v166 = vmul.f32 %v110, %v155
    %v167 = vpow.pop %v166
    %v168 = vmul.f32 %v165, %v167
    %v169 = vadd.f32 %v142, %v168
    %v170 = vld [vmem:[#allocation5 + $0x3] sm:$0x1]
    %v171 = vld [vmem:[#allocation7 + $0x3] sm:$0x1]
    %v172 = vld [vmem:[#allocation8 + $0x3] sm:$0x1]
    %173 = vset.pattern.permute.xlu0 3
    %174 = vperm.xlu0 %173, %v81
    %v175 = vpop.permute.xlu0 %174
    %v177 = vlaneseq
    %v178 = vshrl.u32 %v177, 7
    %v179 = vsub.s32 0, %v178
    %v180 = vrot.slane %v170, %v179
    %v181 = vsub.f32 %v175, %v180
    %v182 = vmul.f32 %v181, %v181
    %v183 = vlaneseq
    %v184 = vshrl.u32 %v183, 7
    %v185 = vsub.s32 0, %v184
    %v186 = vrot.slane %v172, %v185
    %v187 = vmul.f32 %v186, %v182
    %v188 = vlaneseq
    %v189 = vshrl.u32 %v188, 7
    %v190 = vsub.s32 0, %v189
    %v191 = vrot.slane %v171, %v190
    %v192 = vsub.f32 %v191, %v187
    %v193 = vmul.f32 %v110, %v182
    %v194 = vpow.pop %v193
    %v195 = vmul.f32 %v192, %v194
    %v196 = vadd.f32 %v169, %v195
    %v197 = vld [vmem:[#allocation5 + $0x4] sm:$0x1]
    %v198 = vld [vmem:[#allocation7 + $0x4] sm:$0x1]
    %v199 = vld [vmem:[#allocation8 + $0x4] sm:$0x1]
    %200 = vset.pattern.permute.xlu0 4
    %201 = vperm.xlu0 %200, %v81
    %v202 = vpop.permute.xlu0 %201
    %v204 = vlaneseq
    %v205 = vshrl.u32 %v204, 7
    %v206 = vsub.s32 0, %v205
    %v207 = vrot.slane %v197, %v206
    %v208 = vsub.f32 %v202, %v207
    %v209 = vmul.f32 %v208, %v208
    %v210 = vlaneseq
    %v211 = vshrl.u32 %v210, 7
    %v212 = vsub.s32 0, %v211
    %v213 = vrot.slane %v199, %v212
    %v214 = vmul.f32 %v213, %v209
    %v215 = vlaneseq
    %v216 = vshrl.u32 %v215, 7
    %v217 = vsub.s32 0, %v216
    %v218 = vrot.slane %v198, %v217
    %v219 = vsub.f32 %v218, %v214
    %v220 = vmul.f32 %v110, %v209
    %v221 = vpow.pop %v220
    %v222 = vmul.f32 %v219, %v221
    %v223 = vadd.f32 %v196, %v222
    %v224 = vld [vmem:[#allocation5 + $0x5] sm:$0x1]
    %v225 = vld [vmem:[#allocation7 + $0x5] sm:$0x1]
    %v226 = vld [vmem:[#allocation8 + $0x5] sm:$0x1]
    %227 = vset.pattern.permute.xlu0 5
    %228 = vperm.xlu0 %227, %v81
    %v229 = vpop.permute.xlu0 %228
    %v231 = vlaneseq
    %v232 = vshrl.u32 %v231, 7
    %v233 = vsub.s32 0, %v232
    %v234 = vrot.slane %v224, %v233
    %v235 = vsub.f32 %v229, %v234
    %v236 = vmul.f32 %v235, %v235
    %v237 = vlaneseq
    %v238 = vshrl.u32 %v237, 7
    %v239 = vsub.s32 0, %v238
    %v240 = vrot.slane %v226, %v239
    %v241 = vmul.f32 %v240, %v236
    %v242 = vlaneseq
    %v243 = vshrl.u32 %v242, 7
    %v244 = vsub.s32 0, %v243
    %v245 = vrot.slane %v225, %v244
    %v246 = vsub.f32 %v245, %v241
    %v247 = vmul.f32 %v110, %v236
    %v248 = vpow.pop %v247
    %v249 = vmul.f32 %v246, %v248
    %v250 = vadd.f32 %v223, %v249
    %v251 = vld [vmem:[#allocation5 + $0x6] sm:$0x1]
    %v252 = vld [vmem:[#allocation7 + $0x6] sm:$0x1]
    %v253 = vld [vmem:[#allocation8 + $0x6] sm:$0x1]
    %254 = vset.pattern.permute.xlu0 6
    %255 = vperm.xlu0 %254, %v81
    %v256 = vpop.permute.xlu0 %255
    %v258 = vlaneseq
    %v259 = vshrl.u32 %v258, 7
    %v260 = vsub.s32 0, %v259
    %v261 = vrot.slane %v251, %v260
    %v262 = vsub.f32 %v256, %v261
    %v263 = vmul.f32 %v262, %v262
    %v264 = vlaneseq
    %v265 = vshrl.u32 %v264, 7
    %v266 = vsub.s32 0, %v265
    %v267 = vrot.slane %v253, %v266
    %v268 = vmul.f32 %v267, %v263
    %v269 = vlaneseq
    %v270 = vshrl.u32 %v269, 7
    %v271 = vsub.s32 0, %v270
    %v272 = vrot.slane %v252, %v271
    %v273 = vsub.f32 %v272, %v268
    %v274 = vmul.f32 %v110, %v263
    %v275 = vpow.pop %v274
    %v276 = vmul.f32 %v273, %v275
    %v277 = vadd.f32 %v250, %v276
    %v278 = vld [vmem:[#allocation5 + $0x7] sm:$0x1]
    %v279 = vld [vmem:[#allocation7 + $0x7] sm:$0x1]
    %v280 = vld [vmem:[#allocation8 + $0x7] sm:$0x1]
    %281 = vset.pattern.permute.xlu0 7
    %282 = vperm.xlu0 %281, %v81
    %v283 = vpop.permute.xlu0 %282
    %v285 = vlaneseq
    %v286 = vshrl.u32 %v285, 7
    %v287 = vsub.s32 0, %v286
    %v288 = vrot.slane %v278, %v287
    %v289 = vsub.f32 %v283, %v288
    %v290 = vmul.f32 %v289, %v289
    %v291 = vlaneseq
    %v292 = vshrl.u32 %v291, 7
    %v293 = vsub.s32 0, %v292
    %v294 = vrot.slane %v280, %v293
    %v295 = vmul.f32 %v294, %v290
    %v296 = vlaneseq
    %v297 = vshrl.u32 %v296, 7
    %v298 = vsub.s32 0, %v297
    %v299 = vrot.slane %v279, %v298
    %v300 = vsub.f32 %v299, %v295
    %v301 = vmul.f32 %v110, %v290
    %v302 = vpow.pop %v301
    %v303 = vmul.f32 %v300, %v302
    %v304 = vadd.f32 %v277, %v303
    %v305 = vld [vmem:[#allocation5 + $0x8] sm:$0x1]
    %v306 = vld [vmem:[#allocation7 + $0x8] sm:$0x1]
    %v307 = vld [vmem:[#allocation8 + $0x8] sm:$0x1]
    %308 = vset.pattern.permute.xlu0 8
    %309 = vperm.xlu0 %308, %v81
    %v310 = vpop.permute.xlu0 %309
    %v312 = vlaneseq
    %v313 = vshrl.u32 %v312, 7
    %v314 = vsub.s32 0, %v313
    %v315 = vrot.slane %v305, %v314
    %v316 = vsub.f32 %v310, %v315
    %v317 = vmul.f32 %v316, %v316
    %v318 = vlaneseq
    %v319 = vshrl.u32 %v318, 7
    %v320 = vsub.s32 0, %v319
    %v321 = vrot.slane %v307, %v320
    %v322 = vmul.f32 %v321, %v317
    %v323 = vlaneseq
    %v324 = vshrl.u32 %v323, 7
    %v325 = vsub.s32 0, %v324
    %v326 = vrot.slane %v306, %v325
    %v327 = vsub.f32 %v326, %v322
    %v328 = vmul.f32 %v110, %v317
    %v329 = vpow.pop %v328
    %v330 = vmul.f32 %v327, %v329
    %v331 = vadd.f32 %v304, %v330
    %v332 = vld [vmem:[#allocation5 + $0x9] sm:$0x1]
    %v333 = vld [vmem:[#allocation7 + $0x9] sm:$0x1]
    %v334 = vld [vmem:[#allocation8 + $0x9] sm:$0x1]
    %335 = vset.pattern.permute.xlu0 9
    %336 = vperm.xlu0 %335, %v81
    %v337 = vpop.permute.xlu0 %336
    %v339 = vlaneseq
    %v340 = vshrl.u32 %v339, 7
    %v341 = vsub.s32 0, %v340
    %v342 = vrot.slane %v332, %v341
    %v343 = vsub.f32 %v337, %v342
    %v344 = vmul.f32 %v343, %v343
    %v345 = vlaneseq
    %v346 = vshrl.u32 %v345, 7
    %v347 = vsub.s32 0, %v346
    %v348 = vrot.slane %v334, %v347
    %v349 = vmul.f32 %v348, %v344
    %v350 = vlaneseq
    %v351 = vshrl.u32 %v350, 7
    %v352 = vsub.s32 0, %v351
    %v353 = vrot.slane %v333, %v352
    %v354 = vsub.f32 %v353, %v349
    %v355 = vmul.f32 %v110, %v344
    %v356 = vpow.pop %v355
    %v357 = vmul.f32 %v354, %v356
    %v358 = vadd.f32 %v331, %v357
    %v359 = vld [vmem:[#allocation5 + $0xa] sm:$0x1]
    %v360 = vld [vmem:[#allocation7 + $0xa] sm:$0x1]
    %v361 = vld [vmem:[#allocation8 + $0xa] sm:$0x1]
    %362 = vset.pattern.permute.xlu0 10
    %363 = vperm.xlu0 %362, %v81
    %v364 = vpop.permute.xlu0 %363
    %v366 = vlaneseq
    %v367 = vshrl.u32 %v366, 7
    %v368 = vsub.s32 0, %v367
    %v369 = vrot.slane %v359, %v368
    %v370 = vsub.f32 %v364, %v369
    %v371 = vmul.f32 %v370, %v370
    %v372 = vlaneseq
    %v373 = vshrl.u32 %v372, 7
    %v374 = vsub.s32 0, %v373
    %v375 = vrot.slane %v361, %v374
    %v376 = vmul.f32 %v375, %v371
    %v377 = vlaneseq
    %v378 = vshrl.u32 %v377, 7
    %v379 = vsub.s32 0, %v378
    %v380 = vrot.slane %v360, %v379
    %v381 = vsub.f32 %v380, %v376
    %v382 = vmul.f32 %v110, %v371
    %v383 = vpow.pop %v382
    %v384 = vmul.f32 %v381, %v383
    %v385 = vadd.f32 %v358, %v384
    %v386 = vld [vmem:[#allocation5 + $0xb] sm:$0x1]
    %v387 = vld [vmem:[#allocation7 + $0xb] sm:$0x1]
    %v388 = vld [vmem:[#allocation8 + $0xb] sm:$0x1]
    %389 = vset.pattern.permute.xlu0 11
    %390 = vperm.xlu0 %389, %v81
    %v391 = vpop.permute.xlu0 %390
    %v393 = vlaneseq
    %v394 = vshrl.u32 %v393, 7
    %v395 = vsub.s32 0, %v394
    %v396 = vrot.slane %v386, %v395
    %v397 = vsub.f32 %v391, %v396
    %v398 = vmul.f32 %v397, %v397
    %v399 = vlaneseq
    %v400 = vshrl.u32 %v399, 7
    %v401 = vsub.s32 0, %v400
    %v402 = vrot.slane %v388, %v401
    %v403 = vmul.f32 %v402, %v398
    %v404 = vlaneseq
    %v405 = vshrl.u32 %v404, 7
    %v406 = vsub.s32 0, %v405
    %v407 = vrot.slane %v387, %v406
    %v408 = vsub.f32 %v407, %v403
    %v409 = vmul.f32 %v110, %v398
    %v410 = vpow.pop %v409
    %v411 = vmul.f32 %v408, %v410
    %v412 = vadd.f32 %v385, %v411
    %v413 = vld [vmem:[#allocation5 + $0xc] sm:$0x1]
    %v414 = vld [vmem:[#allocation7 + $0xc] sm:$0x1]
    %v415 = vld [vmem:[#allocation8 + $0xc] sm:$0x1]
    %416 = vset.pattern.permute.xlu0 12
    %417 = vperm.xlu0 %416, %v81
    %v418 = vpop.permute.xlu0 %417
    %v420 = vlaneseq
    %v421 = vshrl.u32 %v420, 7
    %v422 = vsub.s32 0, %v421
    %v423 = vrot.slane %v413, %v422
    %v424 = vsub.f32 %v418, %v423
    %v425 = vmul.f32 %v424, %v424
    %v426 = vlaneseq
    %v427 = vshrl.u32 %v426, 7
    %v428 = vsub.s32 0, %v427
    %v429 = vrot.slane %v415, %v428
    %v430 = vmul.f32 %v429, %v425
    %v431 = vlaneseq
    %v432 = vshrl.u32 %v431, 7
    %v433 = vsub.s32 0, %v432
    %v434 = vrot.slane %v414, %v433
    %v435 = vsub.f32 %v434, %v430
    %v436 = vmul.f32 %v110, %v425
    %v437 = vpow.pop %v436
    %v438 = vmul.f32 %v435, %v437
    %v439 = vadd.f32 %v412, %v438
    %v440 = vld [vmem:[#allocation5 + $0xd] sm:$0x1]
    %v441 = vld [vmem:[#allocation7 + $0xd] sm:$0x1]
    %v442 = vld [vmem:[#allocation8 + $0xd] sm:$0x1]
    %443 = vset.pattern.permute.xlu0 13
    %444 = vperm.xlu0 %443, %v81
    %v445 = vpop.permute.xlu0 %444
    %v447 = vlaneseq
    %v448 = vshrl.u32 %v447, 7
    %v449 = vsub.s32 0, %v448
    %v450 = vrot.slane %v440, %v449
    %v451 = vsub.f32 %v445, %v450
    %v452 = vmul.f32 %v451, %v451
    %v453 = vlaneseq
    %v454 = vshrl.u32 %v453, 7
    %v455 = vsub.s32 0, %v454
    %v456 = vrot.slane %v442, %v455
    %v457 = vmul.f32 %v456, %v452
    %v458 = vlaneseq
    %v459 = vshrl.u32 %v458, 7
    %v460 = vsub.s32 0, %v459
    %v461 = vrot.slane %v441, %v460
    %v462 = vsub.f32 %v461, %v457
    %v463 = vmul.f32 %v110, %v452
    %v464 = vpow.pop %v463
    %v465 = vmul.f32 %v462, %v464
    %v466 = vadd.f32 %v439, %v465
    %v467 = vld [vmem:[#allocation5 + $0xe] sm:$0x1]
    %v468 = vld [vmem:[#allocation7 + $0xe] sm:$0x1]
    %v469 = vld [vmem:[#allocation8 + $0xe] sm:$0x1]
    %470 = vset.pattern.permute.xlu0 14
    %471 = vperm.xlu0 %470, %v81
    %v472 = vpop.permute.xlu0 %471
    %v474 = vlaneseq
    %v475 = vshrl.u32 %v474, 7
    %v476 = vsub.s32 0, %v475
    %v477 = vrot.slane %v467, %v476
    %v478 = vsub.f32 %v472, %v477
    %v479 = vmul.f32 %v478, %v478
    %v480 = vlaneseq
    %v481 = vshrl.u32 %v480, 7
    %v482 = vsub.s32 0, %v481
    %v483 = vrot.slane %v469, %v482
    %v484 = vmul.f32 %v483, %v479
    %v485 = vlaneseq
    %v486 = vshrl.u32 %v485, 7
    %v487 = vsub.s32 0, %v486
    %v488 = vrot.slane %v468, %v487
    %v489 = vsub.f32 %v488, %v484
    %v490 = vmul.f32 %v110, %v479
    %v491 = vpow.pop %v490
    %v492 = vmul.f32 %v489, %v491
    %v493 = vadd.f32 %v466, %v492
    %v494 = vld [vmem:[#allocation5 + $0xf] sm:$0x1]
    %v495 = vld [vmem:[#allocation7 + $0xf] sm:$0x1]
    %v496 = vld [vmem:[#allocation8 + $0xf] sm:$0x1]
    %497 = vset.pattern.permute.xlu0 15
    %498 = vperm.xlu0 %497, %v81
    %v499 = vpop.permute.xlu0 %498
    %v501 = vlaneseq
    %v502 = vshrl.u32 %v501, 7
    %v503 = vsub.s32 0, %v502
    %v504 = vrot.slane %v494, %v503
    %v505 = vsub.f32 %v499, %v504
    %v506 = vmul.f32 %v505, %v505
    %v507 = vlaneseq
    %v508 = vshrl.u32 %v507, 7
    %v509 = vsub.s32 0, %v508
    %v510 = vrot.slane %v496, %v509
    %v511 = vmul.f32 %v510, %v506
    %v512 = vlaneseq
    %v513 = vshrl.u32 %v512, 7
    %v514 = vsub.s32 0, %v513
    %v515 = vrot.slane %v495, %v514
    %v516 = vsub.f32 %v515, %v511
    %v517 = vmul.f32 %v110, %v506
    %v518 = vpow.pop %v517
    %v519 = vmul.f32 %v516, %v518
    %v520 = vadd.f32 %v493, %v519
    %v521 = vld [vmem:[#allocation5 + $0x10] sm:$0x1]
    %v522 = vld [vmem:[#allocation7 + $0x10] sm:$0x1]
    %v523 = vld [vmem:[#allocation8 + $0x10] sm:$0x1]
    %524 = vset.pattern.permute.xlu0 16
    %525 = vperm.xlu0 %524, %v81
    %v526 = vpop.permute.xlu0 %525
    %v528 = vlaneseq
    %v529 = vshrl.u32 %v528, 7
    %v530 = vsub.s32 0, %v529
    %v531 = vrot.slane %v521, %v530
    %v532 = vsub.f32 %v526, %v531
    %v533 = vmul.f32 %v532, %v532
    %v534 = vlaneseq
    %v535 = vshrl.u32 %v534, 7
    %v536 = vsub.s32 0, %v535
    %v537 = vrot.slane %v523, %v536
    %v538 = vmul.f32 %v537, %v533
    %v539 = vlaneseq
    %v540 = vshrl.u32 %v539, 7
    %v541 = vsub.s32 0, %v540
    %v542 = vrot.slane %v522, %v541
    %v543 = vsub.f32 %v542, %v538
    %v544 = vmul.f32 %v110, %v533
    %v545 = vpow.pop %v544
    %v546 = vmul.f32 %v543, %v545
    %v547 = vadd.f32 %v520, %v546
    %v548 = vld [vmem:[#allocation5 + $0x11] sm:$0x1]
    %v549 = vld [vmem:[#allocation7 + $0x11] sm:$0x1]
    %v550 = vld [vmem:[#allocation8 + $0x11] sm:$0x1]
    %551 = vset.pattern.permute.xlu0 17
    %552 = vperm.xlu0 %551, %v81
    %v553 = vpop.permute.xlu0 %552
    %v555 = vlaneseq
    %v556 = vshrl.u32 %v555, 7
    %v557 = vsub.s32 0, %v556
    %v558 = vrot.slane %v548, %v557
    %v559 = vsub.f32 %v553, %v558
    %v560 = vmul.f32 %v559, %v559
    %v561 = vlaneseq
    %v562 = vshrl.u32 %v561, 7
    %v563 = vsub.s32 0, %v562
    %v564 = vrot.slane %v550, %v563
    %v565 = vmul.f32 %v564, %v560
    %v566 = vlaneseq
    %v567 = vshrl.u32 %v566, 7
    %v568 = vsub.s32 0, %v567
    %v569 = vrot.slane %v549, %v568
    %v570 = vsub.f32 %v569, %v565
    %v571 = vmul.f32 %v110, %v560
    %v572 = vpow.pop %v571
    %v573 = vmul.f32 %v570, %v572
    %v574 = vadd.f32 %v547, %v573
    %v575 = vld [vmem:[#allocation5 + $0x12] sm:$0x1]
    %v576 = vld [vmem:[#allocation7 + $0x12] sm:$0x1]
    %v577 = vld [vmem:[#allocation8 + $0x12] sm:$0x1]
    %578 = vset.pattern.permute.xlu0 18
    %579 = vperm.xlu0 %578, %v81
    %v580 = vpop.permute.xlu0 %579
    %v582 = vlaneseq
    %v583 = vshrl.u32 %v582, 7
    %v584 = vsub.s32 0, %v583
    %v585 = vrot.slane %v575, %v584
    %v586 = vsub.f32 %v580, %v585
    %v587 = vmul.f32 %v586, %v586
    %v588 = vlaneseq
    %v589 = vshrl.u32 %v588, 7
    %v590 = vsub.s32 0, %v589
    %v591 = vrot.slane %v577, %v590
    %v592 = vmul.f32 %v591, %v587
    %v593 = vlaneseq
    %v594 = vshrl.u32 %v593, 7
    %v595 = vsub.s32 0, %v594
    %v596 = vrot.slane %v576, %v595
    %v597 = vsub.f32 %v596, %v592
    %v598 = vmul.f32 %v110, %v587
    %v599 = vpow.pop %v598
    %v600 = vmul.f32 %v597, %v599
    %v601 = vadd.f32 %v574, %v600
    %v602 = vld [vmem:[#allocation5 + $0x13] sm:$0x1]
    %v603 = vld [vmem:[#allocation7 + $0x13] sm:$0x1]
    %v604 = vld [vmem:[#allocation8 + $0x13] sm:$0x1]
    %605 = vset.pattern.permute.xlu0 19
    %606 = vperm.xlu0 %605, %v81
    %v607 = vpop.permute.xlu0 %606
    %v609 = vlaneseq
    %v610 = vshrl.u32 %v609, 7
    %v611 = vsub.s32 0, %v610
    %v612 = vrot.slane %v602, %v611
    %v613 = vsub.f32 %v607, %v612
    %v614 = vmul.f32 %v613, %v613
    %v615 = vlaneseq
    %v616 = vshrl.u32 %v615, 7
    %v617 = vsub.s32 0, %v616
    %v618 = vrot.slane %v604, %v617
    %v619 = vmul.f32 %v618, %v614
    %v620 = vlaneseq
    %v621 = vshrl.u32 %v620, 7
    %v622 = vsub.s32 0, %v621
    %v623 = vrot.slane %v603, %v622
    %v624 = vsub.f32 %v623, %v619
    %v625 = vmul.f32 %v110, %v614
    %v626 = vpow.pop %v625
    %v627 = vmul.f32 %v624, %v626
    %v628 = vadd.f32 %v601, %v627
    %v629 = vld [vmem:[#allocation5 + $0x14] sm:$0x1]
    %v630 = vld [vmem:[#allocation7 + $0x14] sm:$0x1]
    %v631 = vld [vmem:[#allocation8 + $0x14] sm:$0x1]
    %632 = vset.pattern.permute.xlu0 20
    %633 = vperm.xlu0 %632, %v81
    %v634 = vpop.permute.xlu0 %633
    %v636 = vlaneseq
    %v637 = vshrl.u32 %v636, 7
    %v638 = vsub.s32 0, %v637
    %v639 = vrot.slane %v629, %v638
    %v640 = vsub.f32 %v634, %v639
    %v641 = vmul.f32 %v640, %v640
    %v642 = vlaneseq
    %v643 = vshrl.u32 %v642, 7
    %v644 = vsub.s32 0, %v643
    %v645 = vrot.slane %v631, %v644
    %v646 = vmul.f32 %v645, %v641
    %v647 = vlaneseq
    %v648 = vshrl.u32 %v647, 7
    %v649 = vsub.s32 0, %v648
    %v650 = vrot.slane %v630, %v649
    %v651 = vsub.f32 %v650, %v646
    %v652 = vmul.f32 %v110, %v641
    %v653 = vpow.pop %v652
    %v654 = vmul.f32 %v651, %v653
    %v655 = vadd.f32 %v628, %v654
    %v656 = vld [vmem:[#allocation5 + $0x15] sm:$0x1]
    %v657 = vld [vmem:[#allocation7 + $0x15] sm:$0x1]
    %v658 = vld [vmem:[#allocation8 + $0x15] sm:$0x1]
    %659 = vset.pattern.permute.xlu0 21
    %660 = vperm.xlu0 %659, %v81
    %v661 = vpop.permute.xlu0 %660
    %v663 = vlaneseq
    %v664 = vshrl.u32 %v663, 7
    %v665 = vsub.s32 0, %v664
    %v666 = vrot.slane %v656, %v665
    %v667 = vsub.f32 %v661, %v666
    %v668 = vmul.f32 %v667, %v667
    %v669 = vlaneseq
    %v670 = vshrl.u32 %v669, 7
    %v671 = vsub.s32 0, %v670
    %v672 = vrot.slane %v658, %v671
    %v673 = vmul.f32 %v672, %v668
    %v674 = vlaneseq
    %v675 = vshrl.u32 %v674, 7
    %v676 = vsub.s32 0, %v675
    %v677 = vrot.slane %v657, %v676
    %v678 = vsub.f32 %v677, %v673
    %v679 = vmul.f32 %v110, %v668
    %v680 = vpow.pop %v679
    %v681 = vmul.f32 %v678, %v680
    %v682 = vadd.f32 %v655, %v681
    %v683 = vld [vmem:[#allocation5 + $0x16] sm:$0x1]
    %v684 = vld [vmem:[#allocation7 + $0x16] sm:$0x1]
    %v685 = vld [vmem:[#allocation8 + $0x16] sm:$0x1]
    %686 = vset.pattern.permute.xlu0 22
    %687 = vperm.xlu0 %686, %v81
    %v688 = vpop.permute.xlu0 %687
    %v690 = vlaneseq
    %v691 = vshrl.u32 %v690, 7
    %v692 = vsub.s32 0, %v691
    %v693 = vrot.slane %v683, %v692
    %v694 = vsub.f32 %v688, %v693
    %v695 = vmul.f32 %v694, %v694
    %v696 = vlaneseq
    %v697 = vshrl.u32 %v696, 7
    %v698 = vsub.s32 0, %v697
    %v699 = vrot.slane %v685, %v698
    %v700 = vmul.f32 %v699, %v695
    %v701 = vlaneseq
    %v702 = vshrl.u32 %v701, 7
    %v703 = vsub.s32 0, %v702
    %v704 = vrot.slane %v684, %v703
    %v705 = vsub.f32 %v704, %v700
    %v706 = vmul.f32 %v110, %v695
    %v707 = vpow.pop %v706
    %v708 = vmul.f32 %v705, %v707
    %v709 = vadd.f32 %v682, %v708
    %v710 = vld [vmem:[#allocation5 + $0x17] sm:$0x1]
    %v711 = vld [vmem:[#allocation7 + $0x17] sm:$0x1]
    %v712 = vld [vmem:[#allocation8 + $0x17] sm:$0x1]
    %713 = vset.pattern.permute.xlu0 23
    %714 = vperm.xlu0 %713, %v81
    %v715 = vpop.permute.xlu0 %714
    %v717 = vlaneseq
    %v718 = vshrl.u32 %v717, 7
    %v719 = vsub.s32 0, %v718
    %v720 = vrot.slane %v710, %v719
    %v721 = vsub.f32 %v715, %v720
    %v722 = vmul.f32 %v721, %v721
    %v723 = vlaneseq
    %v724 = vshrl.u32 %v723, 7
    %v725 = vsub.s32 0, %v724
    %v726 = vrot.slane %v712, %v725
    %v727 = vmul.f32 %v726, %v722
    %v728 = vlaneseq
    %v729 = vshrl.u32 %v728, 7
    %v730 = vsub.s32 0, %v729
    %v731 = vrot.slane %v711, %v730
    %v732 = vsub.f32 %v731, %v727
    %v733 = vmul.f32 %v110, %v722
    %v734 = vpow.pop %v733
    %v735 = vmul.f32 %v732, %v734
    %v736 = vadd.f32 %v709, %v735
    %v737 = vld [vmem:[#allocation5 + $0x18] sm:$0x1]
    %v738 = vld [vmem:[#allocation7 + $0x18] sm:$0x1]
    %v739 = vld [vmem:[#allocation8 + $0x18] sm:$0x1]
    %740 = vset.pattern.permute.xlu0 24
    %741 = vperm.xlu0 %740, %v81
    %v742 = vpop.permute.xlu0 %741
    %v744 = vlaneseq
    %v745 = vshrl.u32 %v744, 7
    %v746 = vsub.s32 0, %v745
    %v747 = vrot.slane %v737, %v746
    %v748 = vsub.f32 %v742, %v747
    %v749 = vmul.f32 %v748, %v748
    %v750 = vlaneseq
    %v751 = vshrl.u32 %v750, 7
    %v752 = vsub.s32 0, %v751
    %v753 = vrot.slane %v739, %v752
    %v754 = vmul.f32 %v753, %v749
    %v755 = vlaneseq
    %v756 = vshrl.u32 %v755, 7
    %v757 = vsub.s32 0, %v756
    %v758 = vrot.slane %v738, %v757
    %v759 = vsub.f32 %v758, %v754
    %v760 = vmul.f32 %v110, %v749
    %v761 = vpow.pop %v760
    %v762 = vmul.f32 %v759, %v761
    %v763 = vadd.f32 %v736, %v762
    %v764 = vld [vmem:[#allocation5 + $0x19] sm:$0x1]
    %v765 = vld [vmem:[#allocation7 + $0x19] sm:$0x1]
    %v766 = vld [vmem:[#allocation8 + $0x19] sm:$0x1]
    %767 = vset.pattern.permute.xlu0 25
    %768 = vperm.xlu0 %767, %v81
    %v769 = vpop.permute.xlu0 %768
    %v771 = vlaneseq
    %v772 = vshrl.u32 %v771, 7
    %v773 = vsub.s32 0, %v772
    %v774 = vrot.slane %v764, %v773
    %v775 = vsub.f32 %v769, %v774
    %v776 = vmul.f32 %v775, %v775
    %v777 = vlaneseq
    %v778 = vshrl.u32 %v777, 7
    %v779 = vsub.s32 0, %v778
    %v780 = vrot.slane %v766, %v779
    %v781 = vmul.f32 %v780, %v776
    %v782 = vlaneseq
    %v783 = vshrl.u32 %v782, 7
    %v784 = vsub.s32 0, %v783
    %v785 = vrot.slane %v765, %v784
    %v786 = vsub.f32 %v785, %v781
    %v787 = vmul.f32 %v110, %v776
    %v788 = vpow.pop %v787
    %v789 = vmul.f32 %v786, %v788
    %v790 = vadd.f32 %v763, %v789
    %v791 = vld [vmem:[#allocation5 + $0x1a] sm:$0x1]
    %v792 = vld [vmem:[#allocation7 + $0x1a] sm:$0x1]
    %v793 = vld [vmem:[#allocation8 + $0x1a] sm:$0x1]
    %794 = vset.pattern.permute.xlu0 26
    %795 = vperm.xlu0 %794, %v81
    %v796 = vpop.permute.xlu0 %795
    %v798 = vlaneseq
    %v799 = vshrl.u32 %v798, 7
    %v800 = vsub.s32 0, %v799
    %v801 = vrot.slane %v791, %v800
    %v802 = vsub.f32 %v796, %v801
    %v803 = vmul.f32 %v802, %v802
    %v804 = vlaneseq
    %v805 = vshrl.u32 %v804, 7
    %v806 = vsub.s32 0, %v805
    %v807 = vrot.slane %v793, %v806
    %v808 = vmul.f32 %v807, %v803
    %v809 = vlaneseq
    %v810 = vshrl.u32 %v809, 7
    %v811 = vsub.s32 0, %v810
    %v812 = vrot.slane %v792, %v811
    %v813 = vsub.f32 %v812, %v808
    %v814 = vmul.f32 %v110, %v803
    %v815 = vpow.pop %v814
    %v816 = vmul.f32 %v813, %v815
    %v817 = vadd.f32 %v790, %v816
    %v818 = vld [vmem:[#allocation5 + $0x1b] sm:$0x1]
    %v819 = vld [vmem:[#allocation7 + $0x1b] sm:$0x1]
    %v820 = vld [vmem:[#allocation8 + $0x1b] sm:$0x1]
    %821 = vset.pattern.permute.xlu0 27
    %822 = vperm.xlu0 %821, %v81
    %v823 = vpop.permute.xlu0 %822
    %v825 = vlaneseq
    %v826 = vshrl.u32 %v825, 7
    %v827 = vsub.s32 0, %v826
    %v828 = vrot.slane %v818, %v827
    %v829 = vsub.f32 %v823, %v828
    %v830 = vmul.f32 %v829, %v829
    %v831 = vlaneseq
    %v832 = vshrl.u32 %v831, 7
    %v833 = vsub.s32 0, %v832
    %v834 = vrot.slane %v820, %v833
    %v835 = vmul.f32 %v834, %v830
    %v836 = vlaneseq
    %v837 = vshrl.u32 %v836, 7
    %v838 = vsub.s32 0, %v837
    %v839 = vrot.slane %v819, %v838
    %v840 = vsub.f32 %v839, %v835
    %v841 = vmul.f32 %v110, %v830
    %v842 = vpow.pop %v841
    %v843 = vmul.f32 %v840, %v842
    %v844 = vadd.f32 %v817, %v843
    %v845 = vld [vmem:[#allocation5 + $0x1c] sm:$0x1]
    %v846 = vld [vmem:[#allocation7 + $0x1c] sm:$0x1]
    %v847 = vld [vmem:[#allocation8 + $0x1c] sm:$0x1]
    %848 = vset.pattern.permute.xlu0 28
    %849 = vperm.xlu0 %848, %v81
    %v850 = vpop.permute.xlu0 %849
    %v852 = vlaneseq
    %v853 = vshrl.u32 %v852, 7
    %v854 = vsub.s32 0, %v853
    %v855 = vrot.slane %v845, %v854
    %v856 = vsub.f32 %v850, %v855
    %v857 = vmul.f32 %v856, %v856
    %v858 = vlaneseq
    %v859 = vshrl.u32 %v858, 7
    %v860 = vsub.s32 0, %v859
    %v861 = vrot.slane %v847, %v860
    %v862 = vmul.f32 %v861, %v857
    %v863 = vlaneseq
    %v864 = vshrl.u32 %v863, 7
    %v865 = vsub.s32 0, %v864
    %v866 = vrot.slane %v846, %v865
    %v867 = vsub.f32 %v866, %v862
    %v868 = vmul.f32 %v110, %v857
    %v869 = vpow.pop %v868
    %v870 = vmul.f32 %v867, %v869
    %v871 = vadd.f32 %v844, %v870
    %v872 = vld [vmem:[#allocation5 + $0x1d] sm:$0x1]
    %v873 = vld [vmem:[#allocation7 + $0x1d] sm:$0x1]
    %v874 = vld [vmem:[#allocation8 + $0x1d] sm:$0x1]
    %875 = vset.pattern.permute.xlu0 29
    %876 = vperm.xlu0 %875, %v81
    %v877 = vpop.permute.xlu0 %876
    %v879 = vlaneseq
    %v880 = vshrl.u32 %v879, 7
    %v881 = vsub.s32 0, %v880
    %v882 = vrot.slane %v872, %v881
    %v883 = vsub.f32 %v877, %v882
    %v884 = vmul.f32 %v883, %v883
    %v885 = vlaneseq
    %v886 = vshrl.u32 %v885, 7
    %v887 = vsub.s32 0, %v886
    %v888 = vrot.slane %v874, %v887
    %v889 = vmul.f32 %v888, %v884
    %v890 = vlaneseq
    %v891 = vshrl.u32 %v890, 7
    %v892 = vsub.s32 0, %v891
    %v893 = vrot.slane %v873, %v892
    %v894 = vsub.f32 %v893, %v889
    %v895 = vmul.f32 %v110, %v884
    %v896 = vpow.pop %v895
    %v897 = vmul.f32 %v894, %v896
    %v898 = vadd.f32 %v871, %v897
    %v899 = vld [vmem:[#allocation5 + $0x1e] sm:$0x1]
    %v900 = vld [vmem:[#allocation7 + $0x1e] sm:$0x1]
    %v901 = vld [vmem:[#allocation8 + $0x1e] sm:$0x1]
    %902 = vset.pattern.permute.xlu0 30
    %903 = vperm.xlu0 %902, %v81
    %v904 = vpop.permute.xlu0 %903
    %v906 = vlaneseq
    %v907 = vshrl.u32 %v906, 7
    %v908 = vsub.s32 0, %v907
    %v909 = vrot.slane %v899, %v908
    %v910 = vsub.f32 %v904, %v909
    %v911 = vmul.f32 %v910, %v910
    %v912 = vlaneseq
    %v913 = vshrl.u32 %v912, 7
    %v914 = vsub.s32 0, %v913
    %v915 = vrot.slane %v901, %v914
    %v916 = vmul.f32 %v915, %v911
    %v917 = vlaneseq
    %v918 = vshrl.u32 %v917, 7
    %v919 = vsub.s32 0, %v918
    %v920 = vrot.slane %v900, %v919
    %v921 = vsub.f32 %v920, %v916
    %v922 = vmul.f32 %v110, %v911
    %v923 = vpow.pop %v922
    %v924 = vmul.f32 %v921, %v923
    %v925 = vadd.f32 %v898, %v924
    %v926 = vld [vmem:[#allocation5 + $0x1f] sm:$0x1]
    %v927 = vld [vmem:[#allocation7 + $0x1f] sm:$0x1]
    %v928 = vld [vmem:[#allocation8 + $0x1f] sm:$0x1]
    %929 = vset.pattern.permute.xlu0 31
    %930 = vperm.xlu0 %929, %v81
    %v931 = vpop.permute.xlu0 %930
    %v933 = vlaneseq
    %v934 = vshrl.u32 %v933, 7
    %v935 = vsub.s32 0, %v934
    %v936 = vrot.slane %v926, %v935
    %v937 = vsub.f32 %v931, %v936
    %v938 = vmul.f32 %v937, %v937
    %v939 = vlaneseq
    %v940 = vshrl.u32 %v939, 7
    %v941 = vsub.s32 0, %v940
    %v942 = vrot.slane %v928, %v941
    %v943 = vmul.f32 %v942, %v938
    %v944 = vlaneseq
    %v945 = vshrl.u32 %v944, 7
    %v946 = vsub.s32 0, %v945
    %v947 = vrot.slane %v927, %v946
    %v948 = vsub.f32 %v947, %v943
    %v949 = vmul.f32 %v110, %v938
    %v950 = vpow.pop %v949
    %v951 = vmul.f32 %v948, %v950
    %v952 = vadd.f32 %v925, %v951
    %953 = vst [vmem:[#allocation10] sm:$0xff] %v952
    // Predicated region
    $region42: #{tpu_custom_call.1} parent=1 // pred_check
      _
    $region43: #{tpu_custom_call.1} parent=1 // pred_check_branch
      %955 = sbr.rel (0) target = $region45
    $region44: #{tpu_custom_call.1} parent=1 // pred_region
      %s957 = ssub.s32 128, 128
      %958 = vsyncadd [#allocation4], %s957
      %s960 = sshll.u32 [#allocation10], 4
      %s961 = int_to_ptr.vmem [resolvable:$true] %s960
      %963 = dma.vmem_to_hbm [thread:$0]  %s961, 128, %s5, [#allocation4]
    $region45: #{tpu_custom_call.1} parent=1 // pred_fallthru
      _
    // Predicated region
    $region46: #{tpu_custom_call.1} parent=1 // pred_check
      _
    $region47: #{tpu_custom_call.1} parent=1 // pred_check_branch
      %965 = sbr.rel (0) target = $region49
    $region48: #{tpu_custom_call.1} parent=1 // pred_region
      %966 = dma.done [#allocation4], 128
    $region49: #{tpu_custom_call.1} parent=1 // pred_fallthru
      _
    %967 = vsyncpa [#allocation3], 1
    %968 = vsyncpa [#allocation6], 1
    %969 = vsyncpa [#allocation9], 1
    %970 = vsyncpa [#allocation4], 1

</llo_original>
